<compile_context>
chip_gen: v7x
topology: tpu7x:2x2x1
jax: 0.10.0
libtpu: 0.0.40
codegen_flags: <defaults>
</compile_context>

<pallas_src>
import functools
import math

import jax
import jax.numpy as jnp
from jax.experimental import pallas as pl
from jax.experimental.pallas import tpu as pltpu


def _round_up(n, m):
    return ((n + m - 1) // m) * m


def vae_mlp_encoder_kernel(x_ref, w1_ref, b1_ref, w2_ref, b2_ref, wh_ref, bh_ref,
                           h_ref, mean_ref, logvar_ref, *, u2, latent):
    # f32 HBM read; bf16 cast happens on the VMEM tile (free VPU filler).
    x = x_ref[...].astype(jnp.bfloat16)                       # (TM, F) bf16

    # encode: Linear -> ReLU -> Linear -> ReLU (bf16 MXU inputs, f32 accumulate)
    h1 = jnp.dot(x, w1_ref[...], preferred_element_type=jnp.float32) + b1_ref[...]
    h1 = jnp.maximum(h1, 0.0)
    h2 = jnp.dot(h1.astype(jnp.bfloat16), w2_ref[...],
                 preferred_element_type=jnp.float32) + b2_ref[...]
    h2 = jnp.maximum(h2, 0.0)

    # TODO(synk): torch.isnan(x).any() debug print has no kernel equivalent
    # (debug-only, does not affect outputs) — omitted.
    h2_bf = h2.astype(jnp.bfloat16)
    h_ref[...] = h2_bf[:, :u2]                                # exact-width bf16 hidden

    # Fused z_mean | z_log_var head: one 256-wide MXU matmul, split in-VMEM.
    z = jnp.dot(h2_bf, wh_ref[...], preferred_element_type=jnp.float32) + bh_ref[...]
    mean_ref[...] = z[:, :latent]
    logvar_ref[...] = z[:, latent:2 * latent]


def init_linear_params(key, in_features, out_features, dtype=jnp.float32):
    """PyTorch-style nn.Linear init: U(-1/sqrt(fan_in), 1/sqrt(fan_in)).

    Weight is already transposed to (in_features, out_features); bias is
    (1, out_features) so it broadcasts over the batch dim.
    """
    kw, kb = jax.random.split(key)
    bound = 1.0 / math.sqrt(in_features)
    w = jax.random.uniform(kw, (in_features, out_features), dtype, -bound, bound)
    b = jax.random.uniform(kb, (1, out_features), dtype, -bound, bound)
    return w, b


def pack_params(params, weight_dtype=jnp.bfloat16):
    """One-time re-layout (NOT per call): pad feature widths to 128 multiples,
    cast weights to bf16, fuse the two latent heads into one weight/bias.
    Biases stay f32 (tiny; added after the f32 accumulation).
    Invariant: padded weight/bias columns are exact zeros."""
    (w1, b1), (w2, b2), (wm, bm), (wv, bv) = params
    F, U1 = w1.shape
    U2 = w2.shape[1]
    L = wm.shape[1]
    U1p = _round_up(U1, 128)
    U2p = _round_up(U2, 128)
    Hp = _round_up(2 * L, 128)

    w1p = jnp.zeros((F, U1p), weight_dtype).at[:, :U1].set(w1.astype(weight_dtype))
    b1p = jnp.zeros((1, U1p), jnp.float32).at[:, :U1].set(b1)
    w2p = jnp.zeros((U1p, U2p), weight_dtype).at[:U1, :U2].set(w2.astype(weight_dtype))
    b2p = jnp.zeros((1, U2p), jnp.float32).at[:, :U2].set(b2)
    whp = (jnp.zeros((U2p, Hp), weight_dtype)
           .at[:U2, :L].set(wm.astype(weight_dtype))
           .at[:U2, L:2 * L].set(wv.astype(weight_dtype)))
    bhp = (jnp.zeros((1, Hp), jnp.float32)
           .at[:, :L].set(bm)
           .at[:, L:2 * L].set(bv))
    return (w1p, b1p, w2p, b2p, whp, bhp), (U2, L)


def vae_mlp_encoder(x, packed, dims):
    """x: (B, C, H, W) f32 NCHW. Returns (h, mean, logvar) matching the
    PyTorch module's (x, mean, logvar); h is bf16 (matches the activation the
    latent heads consume), mean/logvar are f32 exact-width."""
    w1, b1, w2, b2, wh, bh = packed
    U2, L = dims
    B = x.shape[0]
    F = w1.shape[0]
    U1p = w1.shape[1]
    U2p = w2.shape[1]
    Hp = wh.shape[1]

    flat = x.reshape(B, -1)                       # nn.Flatten on NCHW, stays f32
    Bp = _round_up(B, 8)                          # dense 8-row sublane tiles
    if Bp != B:
        flat = jnp.pad(flat, ((0, Bp - B), (0, 0)))

    # Tile size: one tile for small batches; >=2 grid steps (v7x dual TC) and
    # up to 512 rows per step at large batches (per-step overhead + MXU
    # M-amortization).
    if Bp < 256:
        TM = Bp
    elif Bp <= 1024:
        TM = _round_up(pl.cdiv(Bp, 2), 8)
    else:
        TM = 512
    grid = (pl.cdiv(Bp, TM),)

    def pinned(shape):
        # Same block index every grid step -> weights stay VMEM-resident.
        return pl.BlockSpec(shape, lambda i: (0, 0))

    flops = 2 * Bp * (F * U1p + U1p * U2p + U2p * Hp)
    bytes_accessed = (
        4 * flat.size                               # f32 input
        + 2 * (w1.size + w2.size + wh.size)         # bf16 weights
        + 4 * (b1.size + b2.size + bh.size)         # f32 biases
        + 2 * Bp * U2                               # bf16 hidden out
        + 4 * Bp * 2 * L                            # f32 mean + logvar
    )

    kernel = functools.partial(vae_mlp_encoder_kernel, u2=U2, latent=L)

    h, mean, logvar = pl.pallas_call(
        kernel,
        out_shape=(
            jax.ShapeDtypeStruct((Bp, U2), jnp.bfloat16),   # hidden, exact width
            jax.ShapeDtypeStruct((Bp, L), jnp.float32),     # z_mean, exact width
            jax.ShapeDtypeStruct((Bp, L), jnp.float32),     # z_log_var, exact width
        ),
        grid=grid,
        in_specs=[
            pl.BlockSpec((TM, F), lambda i: (i, 0)),        # x: blocked on batch
            pinned((F, U1p)), pinned((1, U1p)),             # w1, b1
            pinned((U1p, U2p)), pinned((1, U2p)),           # w2, b2
            pinned((U2p, Hp)), pinned((1, Hp)),             # fused head w, b
        ],
        out_specs=(
            pl.BlockSpec((TM, U2), lambda i: (i, 0)),
            pl.BlockSpec((TM, L), lambda i: (i, 0)),
            pl.BlockSpec((TM, L), lambda i: (i, 0)),
        ),
        compiler_params=pltpu.CompilerParams(
            dimension_semantics=("parallel",)),
        cost_estimate=pl.CostEstimate(
            flops=flops, transcendentals=0, bytes_accessed=bytes_accessed),
    )(flat, w1, b1, w2, b2, wh, bh)

    if Bp != B:   # cheap leading-dim (contiguous) slice to drop batch padding
        h, mean, logvar = h[:B], mean[:B], logvar[:B]
    return h, mean, logvar


if __name__ == "__main__":
    # Shapes consistent with VAEMLPEncoder(shape=(4, 16, 16)) defaults:
    # flatten_size = 4*16*16 = 1024, units_dim = (400, 400), latent_dim = 100.
    B, C, H, W = 2, 4, 16, 16
    units_dim = (400, 400)
    latent_dim = 100
    flatten_size = C * H * W

    root = jax.random.PRNGKey(0)
    kx, k1, k2, k3, k4 = jax.random.split(root, 5)

    x = jax.random.normal(kx, (B, C, H, W), jnp.float32)

    params = (
        init_linear_params(k1, flatten_size, units_dim[0]),  # encode Linear 1
        init_linear_params(k2, units_dim[0], units_dim[1]),  # encode Linear 2
        init_linear_params(k3, units_dim[1], latent_dim),    # z_mean
        init_linear_params(k4, units_dim[1], latent_dim),    # z_log_var
    )
    packed, dims = pack_params(params)

    h, mean, logvar = vae_mlp_encoder(x, packed, dims)
    jax.block_until_ready((h, mean, logvar))

    # Pure-JAX reference using the SAME bf16-packed weights (f32 math), so the
    # check isolates kernel correctness from the intentional bf16 weight cast.
    U2, L = dims
    w1f, b1p, w2f, b2p, whf, bhp = [jnp.asarray(p, jnp.float32) for p in packed]
    hi = jax.lax.Precision.HIGHEST
    xb = x.reshape(B, -1).astype(jnp.bfloat16).astype(jnp.float32)
    r1 = jnp.maximum(jnp.dot(xb, w1f, precision=hi) + b1p, 0.0)
    r1b = r1.astype(jnp.bfloat16).astype(jnp.float32)
    r2 = jnp.maximum(jnp.dot(r1b, w2f, precision=hi) + b2p, 0.0)
    r2b = r2.astype(jnp.bfloat16).astype(jnp.float32)
    rz = jnp.dot(r2b, whf, precision=hi) + bhp

    assert h.shape == (B, U2) and mean.shape == (B, L) and logvar.shape == (B, L)
    assert jnp.allclose(h.astype(jnp.float32), r2[:, :U2], atol=1e-2, rtol=1e-2)
    assert jnp.allclose(mean, rz[:, :L], atol=2e-3, rtol=2e-3)
    assert jnp.allclose(logvar, rz[:, L:2 * L], atol=2e-3, rtol=2e-3)

    print("KERNEL_OK")
</pallas_src>

<mosaic_0001>
module attributes {stable_mosaic.version = 11 : i64} {
  func.func @vae_mlp_encoder_kernel(%arg0: i32, %arg1: memref<8x1024xf32, #tpu.memory_space<vmem>>, %arg2: memref<1024x512xbf16, #tpu.memory_space<vmem>>, %arg3: memref<1x512xf32, #tpu.memory_space<vmem>>, %arg4: memref<512x512xbf16, #tpu.memory_space<vmem>>, %arg5: memref<1x512xf32, #tpu.memory_space<vmem>>, %arg6: memref<512x256xbf16, #tpu.memory_space<vmem>>, %arg7: memref<1x256xf32, #tpu.memory_space<vmem>>, %arg8: memref<8x400xbf16, #tpu.memory_space<vmem>>, %arg9: memref<8x100xf32, #tpu.memory_space<vmem>>, %arg10: memref<8x100xf32, #tpu.memory_space<vmem>>) attributes {dimension_semantics = [#tpu.dimension_semantics<parallel>], iteration_bounds = array<i64: 1>, scalar_prefetch = 0 : i64, scratch_operands = 0 : i64, tpu.core_type = #tpu.core_type<tc>, window_params = [{transform_indices = @transform_0, window_bounds = array<i64: 8, 1024>}, {pipeline_mode = #tpu.pipeline_mode<synchronous>, transform_indices = @transform_1, window_bounds = array<i64: 1024, 512>}, {pipeline_mode = #tpu.pipeline_mode<synchronous>, transform_indices = @transform_2, window_bounds = array<i64: 1, 512>}, {pipeline_mode = #tpu.pipeline_mode<synchronous>, transform_indices = @transform_3, window_bounds = array<i64: 512, 512>}, {pipeline_mode = #tpu.pipeline_mode<synchronous>, transform_indices = @transform_4, window_bounds = array<i64: 1, 512>}, {pipeline_mode = #tpu.pipeline_mode<synchronous>, transform_indices = @transform_5, window_bounds = array<i64: 512, 256>}, {pipeline_mode = #tpu.pipeline_mode<synchronous>, transform_indices = @transform_6, window_bounds = array<i64: 1, 256>}, {transform_indices = @transform_7, window_bounds = array<i64: 8, 400>}, {transform_indices = @transform_8, window_bounds = array<i64: 8, 100>}, {transform_indices = @transform_9, window_bounds = array<i64: 8, 100>}]} {
    %c0 = arith.constant 0 : index
    %c0_0 = arith.constant 0 : index
    %0 = vector.load %arg1[%c0, %c0_0] : memref<8x1024xf32, #tpu.memory_space<vmem>>, vector<8x1024xf32>
    %1 = arith.truncf %0 : vector<8x1024xf32> to vector<8x1024xbf16>
    %c0_1 = arith.constant 0 : index
    %c0_2 = arith.constant 0 : index
    %2 = vector.load %arg2[%c0_1, %c0_2] : memref<1024x512xbf16, #tpu.memory_space<vmem>>, vector<1024x512xbf16>
    %cst = arith.constant dense<0.000000e+00> : vector<8x512xf32>
    %3 = tpu.matmul %1, %2, %cst {dimension_numbers = #tpu.dot_dimension_numbers<[1], [0], [0], [1], [0, 0, 1, 1], [], []>} : vector<8x1024xbf16>, vector<1024x512xbf16>, vector<8x512xf32> -> vector<8x512xf32>
    %c0_3 = arith.constant 0 : index
    %c0_4 = arith.constant 0 : index
    %4 = vector.load %arg3[%c0_3, %c0_4] : memref<1x512xf32, #tpu.memory_space<vmem>>, vector<1x512xf32>
    %5 = vector.broadcast %4 : vector<1x512xf32> to vector<8x512xf32>
    %6 = arith.addf %3, %5 : vector<8x512xf32>
    %cst_5 = arith.constant 0.000000e+00 : f32
    %7 = vector.broadcast %cst_5 : f32 to vector<8x512xf32>
    %8 = arith.maximumf %6, %7 : vector<8x512xf32>
    %9 = arith.truncf %8 : vector<8x512xf32> to vector<8x512xbf16>
    %c0_6 = arith.constant 0 : index
    %c0_7 = arith.constant 0 : index
    %10 = vector.load %arg4[%c0_6, %c0_7] : memref<512x512xbf16, #tpu.memory_space<vmem>>, vector<512x512xbf16>
    %cst_8 = arith.constant dense<0.000000e+00> : vector<8x512xf32>
    %11 = tpu.matmul %9, %10, %cst_8 {dimension_numbers = #tpu.dot_dimension_numbers<[1], [0], [0], [1], [0, 0, 1, 1], [], []>} : vector<8x512xbf16>, vector<512x512xbf16>, vector<8x512xf32> -> vector<8x512xf32>
    %c0_9 = arith.constant 0 : index
    %c0_10 = arith.constant 0 : index
    %12 = vector.load %arg5[%c0_9, %c0_10] : memref<1x512xf32, #tpu.memory_space<vmem>>, vector<1x512xf32>
    %13 = vector.broadcast %12 : vector<1x512xf32> to vector<8x512xf32>
    %14 = arith.addf %11, %13 : vector<8x512xf32>
    %cst_11 = arith.constant 0.000000e+00 : f32
    %15 = vector.broadcast %cst_11 : f32 to vector<8x512xf32>
    %16 = arith.maximumf %14, %15 : vector<8x512xf32>
    %17 = arith.truncf %16 : vector<8x512xf32> to vector<8x512xbf16>
    %18 = vector.extract_strided_slice %17 {offsets = [0, 0], sizes = [8, 400], strides = [1, 1]} : vector<8x512xbf16> to vector<8x400xbf16>
    %c0_12 = arith.constant 0 : index
    %c0_13 = arith.constant 0 : index
    %19 = vector.load %arg8[%c0_12, %c0_13] : memref<8x400xbf16, #tpu.memory_space<vmem>>, vector<8x400xbf16>
    tpu.vector_store %arg8[%c0_12, %c0_13], %18 {strides = array<i32>} : memref<8x400xbf16, #tpu.memory_space<vmem>>, vector<8x400xbf16>,
    %c0_14 = arith.constant 0 : index
    %c0_15 = arith.constant 0 : index
    %20 = vector.load %arg6[%c0_14, %c0_15] : memref<512x256xbf16, #tpu.memory_space<vmem>>, vector<512x256xbf16>
    %cst_16 = arith.constant dense<0.000000e+00> : vector<8x256xf32>
    %21 = tpu.matmul %17, %20, %cst_16 {dimension_numbers = #tpu.dot_dimension_numbers<[1], [0], [0], [1], [0, 0, 1, 1], [], []>} : vector<8x512xbf16>, vector<512x256xbf16>, vector<8x256xf32> -> vector<8x256xf32>
    %c0_17 = arith.constant 0 : index
    %c0_18 = arith.constant 0 : index
    %22 = vector.load %arg7[%c0_17, %c0_18] : memref<1x256xf32, #tpu.memory_space<vmem>>, vector<1x256xf32>
    %23 = vector.broadcast %22 : vector<1x256xf32> to vector<8x256xf32>
    %24 = arith.addf %21, %23 : vector<8x256xf32>
    %25 = vector.extract_strided_slice %24 {offsets = [0, 0], sizes = [8, 100], strides = [1, 1]} : vector<8x256xf32> to vector<8x100xf32>
    %c0_19 = arith.constant 0 : index
    %c0_20 = arith.constant 0 : index
    %26 = vector.load %arg9[%c0_19, %c0_20] : memref<8x100xf32, #tpu.memory_space<vmem>>, vector<8x100xf32>
    tpu.vector_store %arg9[%c0_19, %c0_20], %25 {strides = array<i32>} : memref<8x100xf32, #tpu.memory_space<vmem>>, vector<8x100xf32>,
    %27 = vector.extract_strided_slice %24 {offsets = [0, 100], sizes = [8, 100], strides = [1, 1]} : vector<8x256xf32> to vector<8x100xf32>
    %c0_21 = arith.constant 0 : index
    %c0_22 = arith.constant 0 : index
    %28 = vector.load %arg10[%c0_21, %c0_22] : memref<8x100xf32, #tpu.memory_space<vmem>>, vector<8x100xf32>
    tpu.vector_store %arg10[%c0_21, %c0_22], %27 {strides = array<i32>} : memref<8x100xf32, #tpu.memory_space<vmem>>, vector<8x100xf32>,
    return
  }
  func.func @transform_0(%arg0: i32) -> (i32, i32) {
    %c0_i32 = arith.constant 0 : i32
    %c0_i32_0 = arith.constant 0 : i32
    return %arg0, %c0_i32 : i32, i32
  }
  func.func @transform_1(%arg0: i32) -> (i32, i32) {
    %c0_i32 = arith.constant 0 : i32
    %c0_i32_0 = arith.constant 0 : i32
    %c0_i32_1 = arith.constant 0 : i32
    return %c0_i32, %c0_i32_0 : i32, i32
  }
  func.func @transform_2(%arg0: i32) -> (i32, i32) {
    %c0_i32 = arith.constant 0 : i32
    %c0_i32_0 = arith.constant 0 : i32
    %c0_i32_1 = arith.constant 0 : i32
    return %c0_i32, %c0_i32_0 : i32, i32
  }
  func.func @transform_3(%arg0: i32) -> (i32, i32) {
    %c0_i32 = arith.constant 0 : i32
    %c0_i32_0 = arith.constant 0 : i32
    %c0_i32_1 = arith.constant 0 : i32
    return %c0_i32, %c0_i32_0 : i32, i32
  }
  func.func @transform_4(%arg0: i32) -> (i32, i32) {
    %c0_i32 = arith.constant 0 : i32
    %c0_i32_0 = arith.constant 0 : i32
    %c0_i32_1 = arith.constant 0 : i32
    return %c0_i32, %c0_i32_0 : i32, i32
  }
  func.func @transform_5(%arg0: i32) -> (i32, i32) {
    %c0_i32 = arith.constant 0 : i32
    %c0_i32_0 = arith.constant 0 : i32
    %c0_i32_1 = arith.constant 0 : i32
    return %c0_i32, %c0_i32_0 : i32, i32
  }
  func.func @transform_6(%arg0: i32) -> (i32, i32) {
    %c0_i32 = arith.constant 0 : i32
    %c0_i32_0 = arith.constant 0 : i32
    %c0_i32_1 = arith.constant 0 : i32
    return %c0_i32, %c0_i32_0 : i32, i32
  }
  func.func @transform_7(%arg0: i32) -> (i32, i32) {
    %c0_i32 = arith.constant 0 : i32
    %c0_i32_0 = arith.constant 0 : i32
    return %arg0, %c0_i32 : i32, i32
  }
  func.func @transform_8(%arg0: i32) -> (i32, i32) {
    %c0_i32 = arith.constant 0 : i32
    %c0_i32_0 = arith.constant 0 : i32
    return %arg0, %c0_i32 : i32, i32
  }
  func.func @transform_9(%arg0: i32) -> (i32, i32) {
    %c0_i32 = arith.constant 0 : i32
    %c0_i32_0 = arith.constant 0 : i32
    return %arg0, %c0_i32 : i32, i32
  }
}

</mosaic_0001>

<llo_original>
// kernel: tpu_custom_call.1
$region0: #{tpu_custom_call.1}
  #allocation0 [shape = 'u32[]', space=smem, size = 0x4, offset = 0x4, fixed_abs, tag = 'smem constant byte address 0x4 - core index']
  #allocation1 [shape = 'u32[144,128]{1,0:T(1,128)}', space=vmem, size = 0x12000, scoped, tag = 'internal scratch']
  %s0 = inlined_call_operand.hbm [shape: f32[8,1024], index: 0, kind: input, shape index: {}]
  %s1 = inlined_call_operand.hbm [shape: bf16[1024,512], index: 1, kind: input, shape index: {}]
  %s2 = inlined_call_operand.vmem [shape: f32[1,512], index: 2, kind: input, shape index: {}]
  %s3 = inlined_call_operand.hbm [shape: bf16[512,512], index: 3, kind: input, shape index: {}]
  %s4 = inlined_call_operand.vmem [shape: f32[1,512], index: 4, kind: input, shape index: {}]
  %s5 = inlined_call_operand.hbm [shape: bf16[512,256], index: 5, kind: input, shape index: {}]
  %s6 = inlined_call_operand.vmem [shape: f32[1,256], index: 6, kind: input, shape index: {}]
  %s7 = inlined_call_operand.hbm [shape: bf16[8,400], index: 7, kind: output, shape index: {0}]
  %s8 = inlined_call_operand.hbm [shape: f32[8,100], index: 8, kind: output, shape index: {1}]
  %s9 = inlined_call_operand.hbm [shape: f32[8,100], index: 9, kind: output, shape index: {2}]
  %10 = xla_tuple %s7, %s8, %s9
  %s11 = sld [smem:[#allocation0]]
  $region70: #{tpu_custom_call.1} parent=0
    _
  %s13 = ssub.s32 1, %s11
  %s14 = scalar_select 0, %s13, %s11
  $region1: #{tpu_custom_call.1} parent=0
    #allocation2 [shape = 'u8[32768]{0}', space=vmem, size = 0x8000, scoped, tag = 'input window, operand 0, single buffered']
    #allocation3 [shape = 's32[1]{0}', space=sflag, size = 0x4, scoped, tag = 'scoped memory for tpu_custom_call.1']
    #allocation4 [shape = 's32[1]{0}', space=sflag, size = 0x4, scoped, tag = 'scoped memory for tpu_custom_call.1']
    #allocation5 [shape = 'u8[1048576]{0}', space=vmem, size = 0x100000, scoped, tag = 'input window, operand 1, single buffered']
    #allocation6 [shape = 's32[1]{0}', space=sflag, size = 0x4, scoped, tag = 'scoped memory for tpu_custom_call.1']
    #allocation7 [shape = 'u8[524288]{0}', space=vmem, size = 0x80000, scoped, tag = 'input window, operand 3, single buffered']
    #allocation8 [shape = 'u8[262144]{0}', space=vmem, size = 0x40000, scoped, tag = 'input window, operand 5, single buffered']
    #allocation9 [shape = 's32[1]{0}', space=sflag, size = 0x4, scoped, tag = 'scoped memory for tpu_custom_call.1']
    #allocation10 [shape = 'u8[8192]{0}', space=vmem, size = 0x2000, scoped, tag = 'output window, operand 0, single buffered']
    #allocation11 [shape = 'u8[4096]{0}', space=vmem, size = 0x1000, scoped, tag = 'output window, operand 1, single buffered']
    #allocation12 [shape = 's32[1]{0}', space=sflag, size = 0x4, scoped, tag = 'scoped memory for tpu_custom_call.1']
    #allocation13 [shape = 'u8[4096]{0}', space=vmem, size = 0x1000, scoped, tag = 'output window, operand 2, single buffered']
    %15 = vsyncpa [#allocation3], 0
    %16 = vsyncpa [#allocation6], 0
    %17 = vsyncpa [#allocation9], 0
    %18 = vsyncpa [#allocation4], 0
    %19 = vsyncpa [#allocation12], 0
    // Predicated region
    $region2: #{tpu_custom_call.1} parent=1 // pred_check
      _
    $region3: #{tpu_custom_call.1} parent=1 // pred_check_branch
      %21 = sbr.rel (0) target = $region5
    $region4: #{tpu_custom_call.1} parent=1 // pred_region
      %s23 = ssub.s32 1024, 1024
      %24 = vsyncadd [#allocation3], %s23
      %s26 = sshll.u32 [#allocation2], 4
      %s27 = int_to_ptr.vmem [resolvable:$true] %s26
      %29 = dma.hbm_to_vmem [thread:$0]  %s0, 1024, %s27, [#allocation3]
    $region5: #{tpu_custom_call.1} parent=1 // pred_fallthru
      _
    // Predicated region
    $region6: #{tpu_custom_call.1} parent=1 // pred_check
      _
    $region7: #{tpu_custom_call.1} parent=1 // pred_check_branch
      %31 = sbr.rel (0) target = $region9
    $region8: #{tpu_custom_call.1} parent=1 // pred_region
      %s33 = ssub.s32 32768, 32768
      %34 = vsyncadd [#allocation6], %s33
      %s35 = sshll.u32 [#allocation5], 4
      %s36 = int_to_ptr.vmem [resolvable:$true] %s35
      %41 = dma.hbm_to_vmem [thread:$0]  %s1, 32768, %s36, [#allocation6], 256, 256, 16
    $region9: #{tpu_custom_call.1} parent=1 // pred_fallthru
      _
    // Predicated region
    $region10: #{tpu_custom_call.1} parent=1 // pred_check
      _
    $region11: #{tpu_custom_call.1} parent=1 // pred_check_branch
      %43 = sbr.rel (0) target = $region13
    $region12: #{tpu_custom_call.1} parent=1 // pred_region
      _
    $region13: #{tpu_custom_call.1} parent=1 // pred_fallthru
      _
    // Predicated region
    $region14: #{tpu_custom_call.1} parent=1 // pred_check
      _
    $region15: #{tpu_custom_call.1} parent=1 // pred_check_branch
      %45 = sbr.rel (0) target = $region17
    $region16: #{tpu_custom_call.1} parent=1 // pred_region
      %s47 = ssub.s32 16384, 16384
      %48 = vsyncadd [#allocation6], %s47
      %s49 = sshll.u32 [#allocation7], 4
      %s50 = int_to_ptr.vmem [resolvable:$true] %s49
      %55 = dma.hbm_to_vmem [thread:$0]  %s3, 16384, %s50, [#allocation6], 256, 256, 16
    $region17: #{tpu_custom_call.1} parent=1 // pred_fallthru
      _
    // Predicated region
    $region18: #{tpu_custom_call.1} parent=1 // pred_check
      _
    $region19: #{tpu_custom_call.1} parent=1 // pred_check_branch
      %57 = sbr.rel (0) target = $region21
    $region20: #{tpu_custom_call.1} parent=1 // pred_region
      _
    $region21: #{tpu_custom_call.1} parent=1 // pred_fallthru
      _
    // Predicated region
    $region22: #{tpu_custom_call.1} parent=1 // pred_check
      _
    $region23: #{tpu_custom_call.1} parent=1 // pred_check_branch
      %59 = sbr.rel (0) target = $region25
    $region24: #{tpu_custom_call.1} parent=1 // pred_region
      %s61 = ssub.s32 8192, 8192
      %62 = vsyncadd [#allocation9], %s61
      %s63 = sshll.u32 [#allocation8], 4
      %s64 = int_to_ptr.vmem [resolvable:$true] %s63
      %69 = dma.hbm_to_vmem [thread:$0]  %s5, 8192, %s64, [#allocation9], 128, 128, 8
    $region25: #{tpu_custom_call.1} parent=1 // pred_fallthru
      _
    // Predicated region
    $region26: #{tpu_custom_call.1} parent=1 // pred_check
      _
    $region27: #{tpu_custom_call.1} parent=1 // pred_check_branch
      %71 = sbr.rel (0) target = $region29
    $region28: #{tpu_custom_call.1} parent=1 // pred_region
      _
    $region29: #{tpu_custom_call.1} parent=1 // pred_fallthru
      _
    // Predicated region
    $region30: #{tpu_custom_call.1} parent=1 // pred_check
      _
    $region31: #{tpu_custom_call.1} parent=1 // pred_check_branch
      %73 = sbr.rel (0) target = $region33
    $region32: #{tpu_custom_call.1} parent=1 // pred_region
      %74 = dma.done [#allocation3], 1024
    $region33: #{tpu_custom_call.1} parent=1 // pred_fallthru
      _
    // Predicated region
    $region34: #{tpu_custom_call.1} parent=1 // pred_check
      _
    $region35: #{tpu_custom_call.1} parent=1 // pred_check_branch
      %76 = sbr.rel (0) target = $region37
    $region36: #{tpu_custom_call.1} parent=1 // pred_region
      %77 = dma.done [#allocation6], 32768
    $region37: #{tpu_custom_call.1} parent=1 // pred_fallthru
      _
    // Predicated region
    $region38: #{tpu_custom_call.1} parent=1 // pred_check
      _
    $region39: #{tpu_custom_call.1} parent=1 // pred_check_branch
      %79 = sbr.rel (0) target = $region41
    $region40: #{tpu_custom_call.1} parent=1 // pred_region
      %80 = dma.done [#allocation6], 16384
    $region41: #{tpu_custom_call.1} parent=1 // pred_fallthru
      _
    // Predicated region
    $region42: #{tpu_custom_call.1} parent=1 // pred_check
      _
    $region43: #{tpu_custom_call.1} parent=1 // pred_check_branch
      %82 = sbr.rel (0) target = $region45
    $region44: #{tpu_custom_call.1} parent=1 // pred_region
      %83 = dma.done [#allocation9], 8192
    $region45: #{tpu_custom_call.1} parent=1 // pred_fallthru
      _
    %v84 = vld [vmem:[#allocation2] sm:$0xff]
    %v85 = vld [vmem:[#allocation2 + $0x8] sm:$0xff]
    %v86 = vld [vmem:[#allocation2 + $0x10] sm:$0xff]
    %v87 = vld [vmem:[#allocation2 + $0x18] sm:$0xff]
    %v88 = vld [vmem:[#allocation2 + $0x20] sm:$0xff]
    %v89 = vld [vmem:[#allocation2 + $0x28] sm:$0xff]
    %v90 = vld [vmem:[#allocation2 + $0x30] sm:$0xff]
    %v91 = vld [vmem:[#allocation2 + $0x38] sm:$0xff]
    %v92 = vpack.c.bf16 %v84, %v84
    %v93 = vpack.c.bf16 %v85, %v85
    %v94 = vpack.c.bf16 %v86, %v86
    %v95 = vpack.c.bf16 %v87, %v87
    %v96 = vpack.c.bf16 %v88, %v88
    %v97 = vpack.c.bf16 %v89, %v89
    %v98 = vpack.c.bf16 %v90, %v90
    %v99 = vpack.c.bf16 %v91, %v91
    %v100 = vld [vmem:[#allocation5] sm:$0xff]
    %v101 = vld [vmem:[#allocation5 + $0x8] sm:$0xff]
    %v102 = vld [vmem:[#allocation5 + $0x10] sm:$0xff]
    %v103 = vld [vmem:[#allocation5 + $0x18] sm:$0xff]
    %v104 = vld [vmem:[#allocation5 + $0x20] sm:$0xff]
    %v105 = vld [vmem:[#allocation5 + $0x28] sm:$0xff]
    %v106 = vld [vmem:[#allocation5 + $0x30] sm:$0xff]
    %v107 = vld [vmem:[#allocation5 + $0x38] sm:$0xff]
    %v108 = vld [vmem:[#allocation5 + $0x40] sm:$0xff]
    %v109 = vld [vmem:[#allocation5 + $0x48] sm:$0xff]
    %v110 = vld [vmem:[#allocation5 + $0x50] sm:$0xff]
    %v111 = vld [vmem:[#allocation5 + $0x58] sm:$0xff]
    %v112 = vld [vmem:[#allocation5 + $0x60] sm:$0xff]
    %v113 = vld [vmem:[#allocation5 + $0x68] sm:$0xff]
    %v114 = vld [vmem:[#allocation5 + $0x70] sm:$0xff]
    %v115 = vld [vmem:[#allocation5 + $0x78] sm:$0xff]
    %v116 = vld [vmem:[#allocation5 + $0x80] sm:$0xff]
    %v117 = vld [vmem:[#allocation5 + $0x88] sm:$0xff]
    %v118 = vld [vmem:[#allocation5 + $0x90] sm:$0xff]
    %v119 = vld [vmem:[#allocation5 + $0x98] sm:$0xff]
    %v120 = vld [vmem:[#allocation5 + $0xa0] sm:$0xff]
    %v121 = vld [vmem:[#allocation5 + $0xa8] sm:$0xff]
    %v122 = vld [vmem:[#allocation5 + $0xb0] sm:$0xff]
    %v123 = vld [vmem:[#allocation5 + $0xb8] sm:$0xff]
    %v124 = vld [vmem:[#allocation5 + $0xc0] sm:$0xff]
    %v125 = vld [vmem:[#allocation5 + $0xc8] sm:$0xff]
    %v126 = vld [vmem:[#allocation5 + $0xd0] sm:$0xff]
    %v127 = vld [vmem:[#allocation5 + $0xd8] sm:$0xff]
    %v128 = vld [vmem:[#allocation5 + $0xe0] sm:$0xff]
    %v129 = vld [vmem:[#allocation5 + $0xe8] sm:$0xff]
    %v130 = vld [vmem:[#allocation5 + $0xf0] sm:$0xff]
    %v131 = vld [vmem:[#allocation5 + $0xf8] sm:$0xff]
    %v132 = vld [vmem:[#allocation5 + $0x100] sm:$0xff]
    %v133 = vld [vmem:[#allocation5 + $0x108] sm:$0xff]
    %v134 = vld [vmem:[#allocation5 + $0x110] sm:$0xff]
    %v135 = vld [vmem:[#allocation5 + $0x118] sm:$0xff]
    %v136 = vld [vmem:[#allocation5 + $0x120] sm:$0xff]
    %v137 = vld [vmem:[#allocation5 + $0x128] sm:$0xff]
    %v138 = vld [vmem:[#allocation5 + $0x130] sm:$0xff]
    %v139 = vld [vmem:[#allocation5 + $0x138] sm:$0xff]
    %v140 = vld [vmem:[#allocation5 + $0x140] sm:$0xff]
    %v141 = vld [vmem:[#allocation5 + $0x148] sm:$0xff]
    %v142 = vld [vmem:[#allocation5 + $0x150] sm:$0xff]
    %v143 = vld [vmem:[#allocation5 + $0x158] sm:$0xff]
    %v144 = vld [vmem:[#allocation5 + $0x160] sm:$0xff]
    %v145 = vld [vmem:[#allocation5 + $0x168] sm:$0xff]
    %v146 = vld [vmem:[#allocation5 + $0x170] sm:$0xff]
    %v147 = vld [vmem:[#allocation5 + $0x178] sm:$0xff]
    %v148 = vld [vmem:[#allocation5 + $0x180] sm:$0xff]
    %v149 = vld [vmem:[#allocation5 + $0x188] sm:$0xff]
    %v150 = vld [vmem:[#allocation5 + $0x190] sm:$0xff]
    %v151 = vld [vmem:[#allocation5 + $0x198] sm:$0xff]
    %v152 = vld [vmem:[#allocation5 + $0x1a0] sm:$0xff]
    %v153 = vld [vmem:[#allocation5 + $0x1a8] sm:$0xff]
    %v154 = vld [vmem:[#allocation5 + $0x1b0] sm:$0xff]
    %v155 = vld [vmem:[#allocation5 + $0x1b8] sm:$0xff]
    %v156 = vld [vmem:[#allocation5 + $0x1c0] sm:$0xff]
    %v157 = vld [vmem:[#allocation5 + $0x1c8] sm:$0xff]
    %v158 = vld [vmem:[#allocation5 + $0x1d0] sm:$0xff]
    %v159 = vld [vmem:[#allocation5 + $0x1d8] sm:$0xff]
    %v160 = vld [vmem:[#allocation5 + $0x1e0] sm:$0xff]
    %v161 = vld [vmem:[#allocation5 + $0x1e8] sm:$0xff]
    %v162 = vld [vmem:[#allocation5 + $0x1f0] sm:$0xff]
    %v163 = vld [vmem:[#allocation5 + $0x1f8] sm:$0xff]
    %v164 = vld [vmem:[#allocation5 + $0x200] sm:$0xff]
    %v165 = vld [vmem:[#allocation5 + $0x208] sm:$0xff]
    %v166 = vld [vmem:[#allocation5 + $0x210] sm:$0xff]
    %v167 = vld [vmem:[#allocation5 + $0x218] sm:$0xff]
    %v168 = vld [vmem:[#allocation5 + $0x220] sm:$0xff]
    %v169 = vld [vmem:[#allocation5 + $0x228] sm:$0xff]
    %v170 = vld [vmem:[#allocation5 + $0x230] sm:$0xff]
    %v171 = vld [vmem:[#allocation5 + $0x238] sm:$0xff]
    %v172 = vld [vmem:[#allocation5 + $0x240] sm:$0xff]
    %v173 = vld [vmem:[#allocation5 + $0x248] sm:$0xff]
    %v174 = vld [vmem:[#allocation5 + $0x250] sm:$0xff]
    %v175 = vld [vmem:[#allocation5 + $0x258] sm:$0xff]
    %v176 = vld [vmem:[#allocation5 + $0x260] sm:$0xff]
    %v177 = vld [vmem:[#allocation5 + $0x268] sm:$0xff]
    %v178 = vld [vmem:[#allocation5 + $0x270] sm:$0xff]
    %v179 = vld [vmem:[#allocation5 + $0x278] sm:$0xff]
    %v180 = vld [vmem:[#allocation5 + $0x280] sm:$0xff]
    %v181 = vld [vmem:[#allocation5 + $0x288] sm:$0xff]
    %v182 = vld [vmem:[#allocation5 + $0x290] sm:$0xff]
    %v183 = vld [vmem:[#allocation5 + $0x298] sm:$0xff]
    %v184 = vld [vmem:[#allocation5 + $0x2a0] sm:$0xff]
    %v185 = vld [vmem:[#allocation5 + $0x2a8] sm:$0xff]
    %v186 = vld [vmem:[#allocation5 + $0x2b0] sm:$0xff]
    %v187 = vld [vmem:[#allocation5 + $0x2b8] sm:$0xff]
    %v188 = vld [vmem:[#allocation5 + $0x2c0] sm:$0xff]
    %v189 = vld [vmem:[#allocation5 + $0x2c8] sm:$0xff]
    %v190 = vld [vmem:[#allocation5 + $0x2d0] sm:$0xff]
    %v191 = vld [vmem:[#allocation5 + $0x2d8] sm:$0xff]
    %v192 = vld [vmem:[#allocation5 + $0x2e0] sm:$0xff]
    %v193 = vld [vmem:[#allocation5 + $0x2e8] sm:$0xff]
    %v194 = vld [vmem:[#allocation5 + $0x2f0] sm:$0xff]
    %v195 = vld [vmem:[#allocation5 + $0x2f8] sm:$0xff]
    %v196 = vld [vmem:[#allocation5 + $0x300] sm:$0xff]
    %v197 = vld [vmem:[#allocation5 + $0x308] sm:$0xff]
    %v198 = vld [vmem:[#allocation5 + $0x310] sm:$0xff]
    %v199 = vld [vmem:[#allocation5 + $0x318] sm:$0xff]
    %v200 = vld [vmem:[#allocation5 + $0x320] sm:$0xff]
    %v201 = vld [vmem:[#allocation5 + $0x328] sm:$0xff]
    %v202 = vld [vmem:[#allocation5 + $0x330] sm:$0xff]
    %v203 = vld [vmem:[#allocation5 + $0x338] sm:$0xff]
    %v204 = vld [vmem:[#allocation5 + $0x340] sm:$0xff]
    %v205 = vld [vmem:[#allocation5 + $0x348] sm:$0xff]
    %v206 = vld [vmem:[#allocation5 + $0x350] sm:$0xff]
    %v207 = vld [vmem:[#allocation5 + $0x358] sm:$0xff]
    %v208 = vld [vmem:[#allocation5 + $0x360] sm:$0xff]
    %v209 = vld [vmem:[#allocation5 + $0x368] sm:$0xff]
    %v210 = vld [vmem:[#allocation5 + $0x370] sm:$0xff]
    %v211 = vld [vmem:[#allocation5 + $0x378] sm:$0xff]
    %v212 = vld [vmem:[#allocation5 + $0x380] sm:$0xff]
    %v213 = vld [vmem:[#allocation5 + $0x388] sm:$0xff]
    %v214 = vld [vmem:[#allocation5 + $0x390] sm:$0xff]
    %v215 = vld [vmem:[#allocation5 + $0x398] sm:$0xff]
    %v216 = vld [vmem:[#allocation5 + $0x3a0] sm:$0xff]
    %v217 = vld [vmem:[#allocation5 + $0x3a8] sm:$0xff]
    %v218 = vld [vmem:[#allocation5 + $0x3b0] sm:$0xff]
    %v219 = vld [vmem:[#allocation5 + $0x3b8] sm:$0xff]
    %v220 = vld [vmem:[#allocation5 + $0x3c0] sm:$0xff]
    %v221 = vld [vmem:[#allocation5 + $0x3c8] sm:$0xff]
    %v222 = vld [vmem:[#allocation5 + $0x3d0] sm:$0xff]
    %v223 = vld [vmem:[#allocation5 + $0x3d8] sm:$0xff]
    %v224 = vld [vmem:[#allocation5 + $0x3e0] sm:$0xff]
    %v225 = vld [vmem:[#allocation5 + $0x3e8] sm:$0xff]
    %v226 = vld [vmem:[#allocation5 + $0x3f0] sm:$0xff]
    %v227 = vld [vmem:[#allocation5 + $0x3f8] sm:$0xff]
    %v228 = vld [vmem:[#allocation5 + $0x400] sm:$0xff]
    %v229 = vld [vmem:[#allocation5 + $0x408] sm:$0xff]
    %v230 = vld [vmem:[#allocation5 + $0x410] sm:$0xff]
    %v231 = vld [vmem:[#allocation5 + $0x418] sm:$0xff]
    %v232 = vld [vmem:[#allocation5 + $0x420] sm:$0xff]
    %v233 = vld [vmem:[#allocation5 + $0x428] sm:$0xff]
    %v234 = vld [vmem:[#allocation5 + $0x430] sm:$0xff]
    %v235 = vld [vmem:[#allocation5 + $0x438] sm:$0xff]
    %v236 = vld [vmem:[#allocation5 + $0x440] sm:$0xff]
    %v237 = vld [vmem:[#allocation5 + $0x448] sm:$0xff]
    %v238 = vld [vmem:[#allocation5 + $0x450] sm:$0xff]
    %v239 = vld [vmem:[#allocation5 + $0x458] sm:$0xff]
    %v240 = vld [vmem:[#allocation5 + $0x460] sm:$0xff]
    %v241 = vld [vmem:[#allocation5 + $0x468] sm:$0xff]
    %v242 = vld [vmem:[#allocation5 + $0x470] sm:$0xff]
    %v243 = vld [vmem:[#allocation5 + $0x478] sm:$0xff]
    %v244 = vld [vmem:[#allocation5 + $0x480] sm:$0xff]
    %v245 = vld [vmem:[#allocation5 + $0x488] sm:$0xff]
    %v246 = vld [vmem:[#allocation5 + $0x490] sm:$0xff]
    %v247 = vld [vmem:[#allocation5 + $0x498] sm:$0xff]
    %v248 = vld [vmem:[#allocation5 + $0x4a0] sm:$0xff]
    %v249 = vld [vmem:[#allocation5 + $0x4a8] sm:$0xff]
    %v250 = vld [vmem:[#allocation5 + $0x4b0] sm:$0xff]
    %v251 = vld [vmem:[#allocation5 + $0x4b8] sm:$0xff]
    %v252 = vld [vmem:[#allocation5 + $0x4c0] sm:$0xff]
    %v253 = vld [vmem:[#allocation5 + $0x4c8] sm:$0xff]
    %v254 = vld [vmem:[#allocation5 + $0x4d0] sm:$0xff]
    %v255 = vld [vmem:[#allocation5 + $0x4d8] sm:$0xff]
    %v256 = vld [vmem:[#allocation5 + $0x4e0] sm:$0xff]
    %v257 = vld [vmem:[#allocation5 + $0x4e8] sm:$0xff]
    %v258 = vld [vmem:[#allocation5 + $0x4f0] sm:$0xff]
    %v259 = vld [vmem:[#allocation5 + $0x4f8] sm:$0xff]
    %v260 = vld [vmem:[#allocation5 + $0x500] sm:$0xff]
    %v261 = vld [vmem:[#allocation5 + $0x508] sm:$0xff]
    %v262 = vld [vmem:[#allocation5 + $0x510] sm:$0xff]
    %v263 = vld [vmem:[#allocation5 + $0x518] sm:$0xff]
    %v264 = vld [vmem:[#allocation5 + $0x520] sm:$0xff]
    %v265 = vld [vmem:[#allocation5 + $0x528] sm:$0xff]
    %v266 = vld [vmem:[#allocation5 + $0x530] sm:$0xff]
    %v267 = vld [vmem:[#allocation5 + $0x538] sm:$0xff]
    %v268 = vld [vmem:[#allocation5 + $0x540] sm:$0xff]
    %v269 = vld [vmem:[#allocation5 + $0x548] sm:$0xff]
    %v270 = vld [vmem:[#allocation5 + $0x550] sm:$0xff]
    %v271 = vld [vmem:[#allocation5 + $0x558] sm:$0xff]
    %v272 = vld [vmem:[#allocation5 + $0x560] sm:$0xff]
    %v273 = vld [vmem:[#allocation5 + $0x568] sm:$0xff]
    %v274 = vld [vmem:[#allocation5 + $0x570] sm:$0xff]
    %v275 = vld [vmem:[#allocation5 + $0x578] sm:$0xff]
    %v276 = vld [vmem:[#allocation5 + $0x580] sm:$0xff]
    %v277 = vld [vmem:[#allocation5 + $0x588] sm:$0xff]
    %v278 = vld [vmem:[#allocation5 + $0x590] sm:$0xff]
    %v279 = vld [vmem:[#allocation5 + $0x598] sm:$0xff]
    %v280 = vld [vmem:[#allocation5 + $0x5a0] sm:$0xff]
    %v281 = vld [vmem:[#allocation5 + $0x5a8] sm:$0xff]
    %v282 = vld [vmem:[#allocation5 + $0x5b0] sm:$0xff]
    %v283 = vld [vmem:[#allocation5 + $0x5b8] sm:$0xff]
    %v284 = vld [vmem:[#allocation5 + $0x5c0] sm:$0xff]
    %v285 = vld [vmem:[#allocation5 + $0x5c8] sm:$0xff]
    %v286 = vld [vmem:[#allocation5 + $0x5d0] sm:$0xff]
    %v287 = vld [vmem:[#allocation5 + $0x5d8] sm:$0xff]
    %v288 = vld [vmem:[#allocation5 + $0x5e0] sm:$0xff]
    %v289 = vld [vmem:[#allocation5 + $0x5e8] sm:$0xff]
    %v290 = vld [vmem:[#allocation5 + $0x5f0] sm:$0xff]
    %v291 = vld [vmem:[#allocation5 + $0x5f8] sm:$0xff]
    %v292 = vld [vmem:[#allocation5 + $0x600] sm:$0xff]
    %v293 = vld [vmem:[#allocation5 + $0x608] sm:$0xff]
    %v294 = vld [vmem:[#allocation5 + $0x610] sm:$0xff]
    %v295 = vld [vmem:[#allocation5 + $0x618] sm:$0xff]
    %v296 = vld [vmem:[#allocation5 + $0x620] sm:$0xff]
    %v297 = vld [vmem:[#allocation5 + $0x628] sm:$0xff]
    %v298 = vld [vmem:[#allocation5 + $0x630] sm:$0xff]
    %v299 = vld [vmem:[#allocation5 + $0x638] sm:$0xff]
    %v300 = vld [vmem:[#allocation5 + $0x640] sm:$0xff]
    %v301 = vld [vmem:[#allocation5 + $0x648] sm:$0xff]
    %v302 = vld [vmem:[#allocation5 + $0x650] sm:$0xff]
    %v303 = vld [vmem:[#allocation5 + $0x658] sm:$0xff]
    %v304 = vld [vmem:[#allocation5 + $0x660] sm:$0xff]
    %v305 = vld [vmem:[#allocation5 + $0x668] sm:$0xff]
    %v306 = vld [vmem:[#allocation5 + $0x670] sm:$0xff]
    %v307 = vld [vmem:[#allocation5 + $0x678] sm:$0xff]
    %v308 = vld [vmem:[#allocation5 + $0x680] sm:$0xff]
    %v309 = vld [vmem:[#allocation5 + $0x688] sm:$0xff]
    %v310 = vld [vmem:[#allocation5 + $0x690] sm:$0xff]
    %v311 = vld [vmem:[#allocation5 + $0x698] sm:$0xff]
    %v312 = vld [vmem:[#allocation5 + $0x6a0] sm:$0xff]
    %v313 = vld [vmem:[#allocation5 + $0x6a8] sm:$0xff]
    %v314 = vld [vmem:[#allocation5 + $0x6b0] sm:$0xff]
    %v315 = vld [vmem:[#allocation5 + $0x6b8] sm:$0xff]
    %v316 = vld [vmem:[#allocation5 + $0x6c0] sm:$0xff]
    %v317 = vld [vmem:[#allocation5 + $0x6c8] sm:$0xff]
    %v318 = vld [vmem:[#allocation5 + $0x6d0] sm:$0xff]
    %v319 = vld [vmem:[#allocation5 + $0x6d8] sm:$0xff]
    %v320 = vld [vmem:[#allocation5 + $0x6e0] sm:$0xff]
    %v321 = vld [vmem:[#allocation5 + $0x6e8] sm:$0xff]
    %v322 = vld [vmem:[#allocation5 + $0x6f0] sm:$0xff]
    %v323 = vld [vmem:[#allocation5 + $0x6f8] sm:$0xff]
    %v324 = vld [vmem:[#allocation5 + $0x700] sm:$0xff]
    %v325 = vld [vmem:[#allocation5 + $0x708] sm:$0xff]
    %v326 = vld [vmem:[#allocation5 + $0x710] sm:$0xff]
    %v327 = vld [vmem:[#allocation5 + $0x718] sm:$0xff]
    %v328 = vld [vmem:[#allocation5 + $0x720] sm:$0xff]
    %v329 = vld [vmem:[#allocation5 + $0x728] sm:$0xff]
    %v330 = vld [vmem:[#allocation5 + $0x730] sm:$0xff]
    %v331 = vld [vmem:[#allocation5 + $0x738] sm:$0xff]
    %v332 = vld [vmem:[#allocation5 + $0x740] sm:$0xff]
    %v333 = vld [vmem:[#allocation5 + $0x748] sm:$0xff]
    %v334 = vld [vmem:[#allocation5 + $0x750] sm:$0xff]
    %v335 = vld [vmem:[#allocation5 + $0x758] sm:$0xff]
    %v336 = vld [vmem:[#allocation5 + $0x760] sm:$0xff]
    %v337 = vld [vmem:[#allocation5 + $0x768] sm:$0xff]
    %v338 = vld [vmem:[#allocation5 + $0x770] sm:$0xff]
    %v339 = vld [vmem:[#allocation5 + $0x778] sm:$0xff]
    %v340 = vld [vmem:[#allocation5 + $0x780] sm:$0xff]
    %v341 = vld [vmem:[#allocation5 + $0x788] sm:$0xff]
    %v342 = vld [vmem:[#allocation5 + $0x790] sm:$0xff]
    %v343 = vld [vmem:[#allocation5 + $0x798] sm:$0xff]
    %v344 = vld [vmem:[#allocation5 + $0x7a0] sm:$0xff]
    %v345 = vld [vmem:[#allocation5 + $0x7a8] sm:$0xff]
    %v346 = vld [vmem:[#allocation5 + $0x7b0] sm:$0xff]
    %v347 = vld [vmem:[#allocation5 + $0x7b8] sm:$0xff]
    %v348 = vld [vmem:[#allocation5 + $0x7c0] sm:$0xff]
    %v349 = vld [vmem:[#allocation5 + $0x7c8] sm:$0xff]
    %v350 = vld [vmem:[#allocation5 + $0x7d0] sm:$0xff]
    %v351 = vld [vmem:[#allocation5 + $0x7d8] sm:$0xff]
    %v352 = vld [vmem:[#allocation5 + $0x7e0] sm:$0xff]
    %v353 = vld [vmem:[#allocation5 + $0x7e8] sm:$0xff]
    %v354 = vld [vmem:[#allocation5 + $0x7f0] sm:$0xff]
    %v355 = vld [vmem:[#allocation5 + $0x7f8] sm:$0xff]
    %v356 = vld [vmem:[%s2] sm:$0xf]
    %v358 = vlaneseq
    %v359 = vshrl.u32 %v358, 7
    %v360 = vsub.s32 0, %v359
    %v361 = vrot.slane %v356, %v360
    %v362 = vlaneseq
    %v363 = vshrl.u32 %v362, 7
    %v364 = vsub.s32 1, %v363
    %v365 = vrot.slane %v356, %v364
    %v366 = vlaneseq
    %v367 = vshrl.u32 %v366, 7
    %v368 = vsub.s32 2, %v367
    %v369 = vrot.slane %v356, %v368
    %v370 = vlaneseq
    %v371 = vshrl.u32 %v370, 7
    %v372 = vsub.s32 3, %v371
    %v373 = vrot.slane %v356, %v372
    %v634 = vunpack.c.l.b16 %v100
    %v635 = vunpack.c.h.b16 %v100
    %v636 = vunpack.c.l.b16 %v101
    %v637 = vunpack.c.h.b16 %v101
    %v638 = vunpack.c.l.b16 %v102
    %v639 = vunpack.c.h.b16 %v102
    %v640 = vunpack.c.l.b16 %v103
    %v641 = vunpack.c.h.b16 %v103
    %v642 = vunpack.c.l.b16 %v104
    %v643 = vunpack.c.h.b16 %v104
    %v644 = vunpack.c.l.b16 %v105
    %v645 = vunpack.c.h.b16 %v105
    %v646 = vunpack.c.l.b16 %v106
    %v647 = vunpack.c.h.b16 %v106
    %v648 = vunpack.c.l.b16 %v107
    %v649 = vunpack.c.h.b16 %v107
    %v650 = vunpack.c.l.b16 %v108
    %v651 = vunpack.c.h.b16 %v108
    %v652 = vunpack.c.l.b16 %v109
    %v653 = vunpack.c.h.b16 %v109
    %v654 = vunpack.c.l.b16 %v110
    %v655 = vunpack.c.h.b16 %v110
    %v656 = vunpack.c.l.b16 %v111
    %v657 = vunpack.c.h.b16 %v111
    %v658 = vunpack.c.l.b16 %v112
    %v659 = vunpack.c.h.b16 %v112
    %v660 = vunpack.c.l.b16 %v113
    %v661 = vunpack.c.h.b16 %v113
    %v662 = vunpack.c.l.b16 %v114
    %v663 = vunpack.c.h.b16 %v114
    %v664 = vunpack.c.l.b16 %v115
    %v665 = vunpack.c.h.b16 %v115
    %v666 = vunpack.c.l.b16 %v116
    %v667 = vunpack.c.h.b16 %v116
    %v668 = vunpack.c.l.b16 %v117
    %v669 = vunpack.c.h.b16 %v117
    %v670 = vunpack.c.l.b16 %v118
    %v671 = vunpack.c.h.b16 %v118
    %v672 = vunpack.c.l.b16 %v119
    %v673 = vunpack.c.h.b16 %v119
    %v674 = vunpack.c.l.b16 %v120
    %v675 = vunpack.c.h.b16 %v120
    %v676 = vunpack.c.l.b16 %v121
    %v677 = vunpack.c.h.b16 %v121
    %v678 = vunpack.c.l.b16 %v122
    %v679 = vunpack.c.h.b16 %v122
    %v680 = vunpack.c.l.b16 %v123
    %v681 = vunpack.c.h.b16 %v123
    %v682 = vunpack.c.l.b16 %v124
    %v683 = vunpack.c.h.b16 %v124
    %v684 = vunpack.c.l.b16 %v125
    %v685 = vunpack.c.h.b16 %v125
    %v686 = vunpack.c.l.b16 %v126
    %v687 = vunpack.c.h.b16 %v126
    %v688 = vunpack.c.l.b16 %v127
    %v689 = vunpack.c.h.b16 %v127
    %v690 = vunpack.c.l.b16 %v128
    %v691 = vunpack.c.h.b16 %v128
    %v692 = vunpack.c.l.b16 %v129
    %v693 = vunpack.c.h.b16 %v129
    %v694 = vunpack.c.l.b16 %v130
    %v695 = vunpack.c.h.b16 %v130
    %v696 = vunpack.c.l.b16 %v131
    %v697 = vunpack.c.h.b16 %v131
    %v698 = vunpack.c.l.b16 %v132
    %v699 = vunpack.c.h.b16 %v132
    %v700 = vunpack.c.l.b16 %v133
    %v701 = vunpack.c.h.b16 %v133
    %v702 = vunpack.c.l.b16 %v134
    %v703 = vunpack.c.h.b16 %v134
    %v704 = vunpack.c.l.b16 %v135
    %v705 = vunpack.c.h.b16 %v135
    %v706 = vunpack.c.l.b16 %v136
    %v707 = vunpack.c.h.b16 %v136
    %v708 = vunpack.c.l.b16 %v137
    %v709 = vunpack.c.h.b16 %v137
    %v710 = vunpack.c.l.b16 %v138
    %v711 = vunpack.c.h.b16 %v138
    %v712 = vunpack.c.l.b16 %v139
    %v713 = vunpack.c.h.b16 %v139
    %v714 = vunpack.c.l.b16 %v140
    %v715 = vunpack.c.h.b16 %v140
    %v716 = vunpack.c.l.b16 %v141
    %v717 = vunpack.c.h.b16 %v141
    %v718 = vunpack.c.l.b16 %v142
    %v719 = vunpack.c.h.b16 %v142
    %v720 = vunpack.c.l.b16 %v143
    %v721 = vunpack.c.h.b16 %v143
    %v722 = vunpack.c.l.b16 %v144
    %v723 = vunpack.c.h.b16 %v144
    %v724 = vunpack.c.l.b16 %v145
    %v725 = vunpack.c.h.b16 %v145
    %v726 = vunpack.c.l.b16 %v146
    %v727 = vunpack.c.h.b16 %v146
    %v728 = vunpack.c.l.b16 %v147
    %v729 = vunpack.c.h.b16 %v147
    %v730 = vunpack.c.l.b16 %v148
    %v731 = vunpack.c.h.b16 %v148
    %v732 = vunpack.c.l.b16 %v149
    %v733 = vunpack.c.h.b16 %v149
    %v734 = vunpack.c.l.b16 %v150
    %v735 = vunpack.c.h.b16 %v150
    %v736 = vunpack.c.l.b16 %v151
    %v737 = vunpack.c.h.b16 %v151
    %v738 = vunpack.c.l.b16 %v152
    %v739 = vunpack.c.h.b16 %v152
    %v740 = vunpack.c.l.b16 %v153
    %v741 = vunpack.c.h.b16 %v153
    %v742 = vunpack.c.l.b16 %v154
    %v743 = vunpack.c.h.b16 %v154
    %v744 = vunpack.c.l.b16 %v155
    %v745 = vunpack.c.h.b16 %v155
    %v746 = vunpack.c.l.b16 %v156
    %v747 = vunpack.c.h.b16 %v156
    %v748 = vunpack.c.l.b16 %v157
    %v749 = vunpack.c.h.b16 %v157
    %v750 = vunpack.c.l.b16 %v158
    %v751 = vunpack.c.h.b16 %v158
    %v752 = vunpack.c.l.b16 %v159
    %v753 = vunpack.c.h.b16 %v159
    %v754 = vunpack.c.l.b16 %v160
    %v755 = vunpack.c.h.b16 %v160
    %v756 = vunpack.c.l.b16 %v161
    %v757 = vunpack.c.h.b16 %v161
    %v758 = vunpack.c.l.b16 %v162
    %v759 = vunpack.c.h.b16 %v162
    %v760 = vunpack.c.l.b16 %v163
    %v761 = vunpack.c.h.b16 %v163
    %v762 = vunpack.c.l.b16 %v164
    %v763 = vunpack.c.h.b16 %v164
    %v764 = vunpack.c.l.b16 %v165
    %v765 = vunpack.c.h.b16 %v165
    %v766 = vunpack.c.l.b16 %v166
    %v767 = vunpack.c.h.b16 %v166
    %v768 = vunpack.c.l.b16 %v167
    %v769 = vunpack.c.h.b16 %v167
    %v770 = vunpack.c.l.b16 %v168
    %v771 = vunpack.c.h.b16 %v168
    %v772 = vunpack.c.l.b16 %v169
    %v773 = vunpack.c.h.b16 %v169
    %v774 = vunpack.c.l.b16 %v170
    %v775 = vunpack.c.h.b16 %v170
    %v776 = vunpack.c.l.b16 %v171
    %v777 = vunpack.c.h.b16 %v171
    %v778 = vunpack.c.l.b16 %v172
    %v779 = vunpack.c.h.b16 %v172
    %v780 = vunpack.c.l.b16 %v173
    %v781 = vunpack.c.h.b16 %v173
    %v782 = vunpack.c.l.b16 %v174
    %v783 = vunpack.c.h.b16 %v174
    %v784 = vunpack.c.l.b16 %v175
    %v785 = vunpack.c.h.b16 %v175
    %v786 = vunpack.c.l.b16 %v176
    %v787 = vunpack.c.h.b16 %v176
    %v788 = vunpack.c.l.b16 %v177
    %v789 = vunpack.c.h.b16 %v177
    %v790 = vunpack.c.l.b16 %v178
    %v791 = vunpack.c.h.b16 %v178
    %v792 = vunpack.c.l.b16 %v179
    %v793 = vunpack.c.h.b16 %v179
    %v794 = vunpack.c.l.b16 %v180
    %v795 = vunpack.c.h.b16 %v180
    %v796 = vunpack.c.l.b16 %v181
    %v797 = vunpack.c.h.b16 %v181
    %v798 = vunpack.c.l.b16 %v182
    %v799 = vunpack.c.h.b16 %v182
    %v800 = vunpack.c.l.b16 %v183
    %v801 = vunpack.c.h.b16 %v183
    %v802 = vunpack.c.l.b16 %v184
    %v803 = vunpack.c.h.b16 %v184
    %v804 = vunpack.c.l.b16 %v185
    %v805 = vunpack.c.h.b16 %v185
    %v806 = vunpack.c.l.b16 %v186
    %v807 = vunpack.c.h.b16 %v186
    %v808 = vunpack.c.l.b16 %v187
    %v809 = vunpack.c.h.b16 %v187
    %v810 = vunpack.c.l.b16 %v188
    %v811 = vunpack.c.h.b16 %v188
    %v812 = vunpack.c.l.b16 %v189
    %v813 = vunpack.c.h.b16 %v189
    %v814 = vunpack.c.l.b16 %v190
    %v815 = vunpack.c.h.b16 %v190
    %v816 = vunpack.c.l.b16 %v191
    %v817 = vunpack.c.h.b16 %v191
    %v818 = vunpack.c.l.b16 %v192
    %v819 = vunpack.c.h.b16 %v192
    %v820 = vunpack.c.l.b16 %v193
    %v821 = vunpack.c.h.b16 %v193
    %v822 = vunpack.c.l.b16 %v194
    %v823 = vunpack.c.h.b16 %v194
    %v824 = vunpack.c.l.b16 %v195
    %v825 = vunpack.c.h.b16 %v195
    %v826 = vunpack.c.l.b16 %v196
    %v827 = vunpack.c.h.b16 %v196
    %v828 = vunpack.c.l.b16 %v197
    %v829 = vunpack.c.h.b16 %v197
    %v830 = vunpack.c.l.b16 %v198
    %v831 = vunpack.c.h.b16 %v198
    %v832 = vunpack.c.l.b16 %v199
    %v833 = vunpack.c.h.b16 %v199
    %v834 = vunpack.c.l.b16 %v200
    %v835 = vunpack.c.h.b16 %v200
    %v836 = vunpack.c.l.b16 %v201
    %v837 = vunpack.c.h.b16 %v201
    %v838 = vunpack.c.l.b16 %v202
    %v839 = vunpack.c.h.b16 %v202
    %v840 = vunpack.c.l.b16 %v203
    %v841 = vunpack.c.h.b16 %v203
    %v842 = vunpack.c.l.b16 %v204
    %v843 = vunpack.c.h.b16 %v204
    %v844 = vunpack.c.l.b16 %v205
    %v845 = vunpack.c.h.b16 %v205
    %v846 = vunpack.c.l.b16 %v206
    %v847 = vunpack.c.h.b16 %v206
    %v848 = vunpack.c.l.b16 %v207
    %v849 = vunpack.c.h.b16 %v207
    %v850 = vunpack.c.l.b16 %v208
    %v851 = vunpack.c.h.b16 %v208
    %v852 = vunpack.c.l.b16 %v209
    %v853 = vunpack.c.h.b16 %v209
    %v854 = vunpack.c.l.b16 %v210
    %v855 = vunpack.c.h.b16 %v210
    %v856 = vunpack.c.l.b16 %v211
    %v857 = vunpack.c.h.b16 %v211
    %v858 = vunpack.c.l.b16 %v212
    %v859 = vunpack.c.h.b16 %v212
    %v860 = vunpack.c.l.b16 %v213
    %v861 = vunpack.c.h.b16 %v213
    %v862 = vunpack.c.l.b16 %v214
    %v863 = vunpack.c.h.b16 %v214
    %v864 = vunpack.c.l.b16 %v215
    %v865 = vunpack.c.h.b16 %v215
    %v866 = vunpack.c.l.b16 %v216
    %v867 = vunpack.c.h.b16 %v216
    %v868 = vunpack.c.l.b16 %v217
    %v869 = vunpack.c.h.b16 %v217
    %v870 = vunpack.c.l.b16 %v218
    %v871 = vunpack.c.h.b16 %v218
    %v872 = vunpack.c.l.b16 %v219
    %v873 = vunpack.c.h.b16 %v219
    %v874 = vunpack.c.l.b16 %v220
    %v875 = vunpack.c.h.b16 %v220
    %v876 = vunpack.c.l.b16 %v221
    %v877 = vunpack.c.h.b16 %v221
    %v878 = vunpack.c.l.b16 %v222
    %v879 = vunpack.c.h.b16 %v222
    %v880 = vunpack.c.l.b16 %v223
    %v881 = vunpack.c.h.b16 %v223
    %v882 = vunpack.c.l.b16 %v224
    %v883 = vunpack.c.h.b16 %v224
    %v884 = vunpack.c.l.b16 %v225
    %v885 = vunpack.c.h.b16 %v225
    %v886 = vunpack.c.l.b16 %v226
    %v887 = vunpack.c.h.b16 %v226
    %v888 = vunpack.c.l.b16 %v227
    %v889 = vunpack.c.h.b16 %v227
    %v890 = vunpack.c.l.b16 %v228
    %v891 = vunpack.c.h.b16 %v228
    %v892 = vunpack.c.l.b16 %v229
    %v893 = vunpack.c.h.b16 %v229
    %v894 = vunpack.c.l.b16 %v230
    %v895 = vunpack.c.h.b16 %v230
    %v896 = vunpack.c.l.b16 %v231
    %v897 = vunpack.c.h.b16 %v231
    %v898 = vunpack.c.l.b16 %v232
    %v899 = vunpack.c.h.b16 %v232
    %v900 = vunpack.c.l.b16 %v233
    %v901 = vunpack.c.h.b16 %v233
    %v902 = vunpack.c.l.b16 %v234
    %v903 = vunpack.c.h.b16 %v234
    %v904 = vunpack.c.l.b16 %v235
    %v905 = vunpack.c.h.b16 %v235
    %v906 = vunpack.c.l.b16 %v236
    %v907 = vunpack.c.h.b16 %v236
    %v908 = vunpack.c.l.b16 %v237
    %v909 = vunpack.c.h.b16 %v237
    %v910 = vunpack.c.l.b16 %v238
    %v911 = vunpack.c.h.b16 %v238
    %v912 = vunpack.c.l.b16 %v239
    %v913 = vunpack.c.h.b16 %v239
    %v914 = vunpack.c.l.b16 %v240
    %v915 = vunpack.c.h.b16 %v240
    %v916 = vunpack.c.l.b16 %v241
    %v917 = vunpack.c.h.b16 %v241
    %v918 = vunpack.c.l.b16 %v242
    %v919 = vunpack.c.h.b16 %v242
    %v920 = vunpack.c.l.b16 %v243
    %v921 = vunpack.c.h.b16 %v243
    %v922 = vunpack.c.l.b16 %v244
    %v923 = vunpack.c.h.b16 %v244
    %v924 = vunpack.c.l.b16 %v245
    %v925 = vunpack.c.h.b16 %v245
    %v926 = vunpack.c.l.b16 %v246
    %v927 = vunpack.c.h.b16 %v246
    %v928 = vunpack.c.l.b16 %v247
    %v929 = vunpack.c.h.b16 %v247
    %v930 = vunpack.c.l.b16 %v248
    %v931 = vunpack.c.h.b16 %v248
    %v932 = vunpack.c.l.b16 %v249
    %v933 = vunpack.c.h.b16 %v249
    %v934 = vunpack.c.l.b16 %v250
    %v935 = vunpack.c.h.b16 %v250
    %v936 = vunpack.c.l.b16 %v251
    %v937 = vunpack.c.h.b16 %v251
    %v938 = vunpack.c.l.b16 %v252
    %v939 = vunpack.c.h.b16 %v252
    %v940 = vunpack.c.l.b16 %v253
    %v941 = vunpack.c.h.b16 %v253
    %v942 = vunpack.c.l.b16 %v254
    %v943 = vunpack.c.h.b16 %v254
    %v944 = vunpack.c.l.b16 %v255
    %v945 = vunpack.c.h.b16 %v255
    %v946 = vunpack.c.l.b16 %v256
    %v947 = vunpack.c.h.b16 %v256
    %v948 = vunpack.c.l.b16 %v257
    %v949 = vunpack.c.h.b16 %v257
    %v950 = vunpack.c.l.b16 %v258
    %v951 = vunpack.c.h.b16 %v258
    %v952 = vunpack.c.l.b16 %v259
    %v953 = vunpack.c.h.b16 %v259
    %v954 = vunpack.c.l.b16 %v260
    %v955 = vunpack.c.h.b16 %v260
    %v956 = vunpack.c.l.b16 %v261
    %v957 = vunpack.c.h.b16 %v261
    %v958 = vunpack.c.l.b16 %v262
    %v959 = vunpack.c.h.b16 %v262
    %v960 = vunpack.c.l.b16 %v263
    %v961 = vunpack.c.h.b16 %v263
    %v962 = vunpack.c.l.b16 %v264
    %v963 = vunpack.c.h.b16 %v264
    %v964 = vunpack.c.l.b16 %v265
    %v965 = vunpack.c.h.b16 %v265
    %v966 = vunpack.c.l.b16 %v266
    %v967 = vunpack.c.h.b16 %v266
    %v968 = vunpack.c.l.b16 %v267
    %v969 = vunpack.c.h.b16 %v267
    %v970 = vunpack.c.l.b16 %v268
    %v971 = vunpack.c.h.b16 %v268
    %v972 = vunpack.c.l.b16 %v269
    %v973 = vunpack.c.h.b16 %v269
    %v974 = vunpack.c.l.b16 %v270
    %v975 = vunpack.c.h.b16 %v270
    %v976 = vunpack.c.l.b16 %v271
    %v977 = vunpack.c.h.b16 %v271
    %v978 = vunpack.c.l.b16 %v272
    %v979 = vunpack.c.h.b16 %v272
    %v980 = vunpack.c.l.b16 %v273
    %v981 = vunpack.c.h.b16 %v273
    %v982 = vunpack.c.l.b16 %v274
    %v983 = vunpack.c.h.b16 %v274
    %v984 = vunpack.c.l.b16 %v275
    %v985 = vunpack.c.h.b16 %v275
    %v986 = vunpack.c.l.b16 %v276
    %v987 = vunpack.c.h.b16 %v276
    %v988 = vunpack.c.l.b16 %v277
    %v989 = vunpack.c.h.b16 %v277
    %v990 = vunpack.c.l.b16 %v278
    %v991 = vunpack.c.h.b16 %v278
    %v992 = vunpack.c.l.b16 %v279
    %v993 = vunpack.c.h.b16 %v279
    %v994 = vunpack.c.l.b16 %v280
    %v995 = vunpack.c.h.b16 %v280
    %v996 = vunpack.c.l.b16 %v281
    %v997 = vunpack.c.h.b16 %v281
    %v998 = vunpack.c.l.b16 %v282
    %v999 = vunpack.c.h.b16 %v282
    %v1000 = vunpack.c.l.b16 %v283
    %v1001 = vunpack.c.h.b16 %v283
    %v1002 = vunpack.c.l.b16 %v284
    %v1003 = vunpack.c.h.b16 %v284
    %v1004 = vunpack.c.l.b16 %v285
    %v1005 = vunpack.c.h.b16 %v285
    %v1006 = vunpack.c.l.b16 %v286
    %v1007 = vunpack.c.h.b16 %v286
    %v1008 = vunpack.c.l.b16 %v287
    %v1009 = vunpack.c.h.b16 %v287
    %v1010 = vunpack.c.l.b16 %v288
    %v1011 = vunpack.c.h.b16 %v288
    %v1012 = vunpack.c.l.b16 %v289
    %v1013 = vunpack.c.h.b16 %v289
    %v1014 = vunpack.c.l.b16 %v290
    %v1015 = vunpack.c.h.b16 %v290
    %v1016 = vunpack.c.l.b16 %v291
    %v1017 = vunpack.c.h.b16 %v291
    %v1018 = vunpack.c.l.b16 %v292
    %v1019 = vunpack.c.h.b16 %v292
    %v1020 = vunpack.c.l.b16 %v293
    %v1021 = vunpack.c.h.b16 %v293
    %v1022 = vunpack.c.l.b16 %v294
    %v1023 = vunpack.c.h.b16 %v294
    %v1024 = vunpack.c.l.b16 %v295
    %v1025 = vunpack.c.h.b16 %v295
    %v1026 = vunpack.c.l.b16 %v296
    %v1027 = vunpack.c.h.b16 %v296
    %v1028 = vunpack.c.l.b16 %v297
    %v1029 = vunpack.c.h.b16 %v297
    %v1030 = vunpack.c.l.b16 %v298
    %v1031 = vunpack.c.h.b16 %v298
    %v1032 = vunpack.c.l.b16 %v299
    %v1033 = vunpack.c.h.b16 %v299
    %v1034 = vunpack.c.l.b16 %v300
    %v1035 = vunpack.c.h.b16 %v300
    %v1036 = vunpack.c.l.b16 %v301
    %v1037 = vunpack.c.h.b16 %v301
    %v1038 = vunpack.c.l.b16 %v302
    %v1039 = vunpack.c.h.b16 %v302
    %v1040 = vunpack.c.l.b16 %v303
    %v1041 = vunpack.c.h.b16 %v303
    %v1042 = vunpack.c.l.b16 %v304
    %v1043 = vunpack.c.h.b16 %v304
    %v1044 = vunpack.c.l.b16 %v305
    %v1045 = vunpack.c.h.b16 %v305
    %v1046 = vunpack.c.l.b16 %v306
    %v1047 = vunpack.c.h.b16 %v306
    %v1048 = vunpack.c.l.b16 %v307
    %v1049 = vunpack.c.h.b16 %v307
    %v1050 = vunpack.c.l.b16 %v308
    %v1051 = vunpack.c.h.b16 %v308
    %v1052 = vunpack.c.l.b16 %v309
    %v1053 = vunpack.c.h.b16 %v309
    %v1054 = vunpack.c.l.b16 %v310
    %v1055 = vunpack.c.h.b16 %v310
    %v1056 = vunpack.c.l.b16 %v311
    %v1057 = vunpack.c.h.b16 %v311
    %v1058 = vunpack.c.l.b16 %v312
    %v1059 = vunpack.c.h.b16 %v312
    %v1060 = vunpack.c.l.b16 %v313
    %v1061 = vunpack.c.h.b16 %v313
    %v1062 = vunpack.c.l.b16 %v314
    %v1063 = vunpack.c.h.b16 %v314
    %v1064 = vunpack.c.l.b16 %v315
    %v1065 = vunpack.c.h.b16 %v315
    %v1066 = vunpack.c.l.b16 %v316
    %v1067 = vunpack.c.h.b16 %v316
    %v1068 = vunpack.c.l.b16 %v317
    %v1069 = vunpack.c.h.b16 %v317
    %v1070 = vunpack.c.l.b16 %v318
    %v1071 = vunpack.c.h.b16 %v318
    %v1072 = vunpack.c.l.b16 %v319
    %v1073 = vunpack.c.h.b16 %v319
    %v1074 = vunpack.c.l.b16 %v320
    %v1075 = vunpack.c.h.b16 %v320
    %v1076 = vunpack.c.l.b16 %v321
    %v1077 = vunpack.c.h.b16 %v321
    %v1078 = vunpack.c.l.b16 %v322
    %v1079 = vunpack.c.h.b16 %v322
    %v1080 = vunpack.c.l.b16 %v323
    %v1081 = vunpack.c.h.b16 %v323
    %v1082 = vunpack.c.l.b16 %v324
    %v1083 = vunpack.c.h.b16 %v324
    %v1084 = vunpack.c.l.b16 %v325
    %v1085 = vunpack.c.h.b16 %v325
    %v1086 = vunpack.c.l.b16 %v326
    %v1087 = vunpack.c.h.b16 %v326
    %v1088 = vunpack.c.l.b16 %v327
    %v1089 = vunpack.c.h.b16 %v327
    %v1090 = vunpack.c.l.b16 %v328
    %v1091 = vunpack.c.h.b16 %v328
    %v1092 = vunpack.c.l.b16 %v329
    %v1093 = vunpack.c.h.b16 %v329
    %v1094 = vunpack.c.l.b16 %v330
    %v1095 = vunpack.c.h.b16 %v330
    %v1096 = vunpack.c.l.b16 %v331
    %v1097 = vunpack.c.h.b16 %v331
    %v1098 = vunpack.c.l.b16 %v332
    %v1099 = vunpack.c.h.b16 %v332
    %v1100 = vunpack.c.l.b16 %v333
    %v1101 = vunpack.c.h.b16 %v333
    %v1102 = vunpack.c.l.b16 %v334
    %v1103 = vunpack.c.h.b16 %v334
    %v1104 = vunpack.c.l.b16 %v335
    %v1105 = vunpack.c.h.b16 %v335
    %v1106 = vunpack.c.l.b16 %v336
    %v1107 = vunpack.c.h.b16 %v336
    %v1108 = vunpack.c.l.b16 %v337
    %v1109 = vunpack.c.h.b16 %v337
    %v1110 = vunpack.c.l.b16 %v338
    %v1111 = vunpack.c.h.b16 %v338
    %v1112 = vunpack.c.l.b16 %v339
    %v1113 = vunpack.c.h.b16 %v339
    %v1114 = vunpack.c.l.b16 %v340
    %v1115 = vunpack.c.h.b16 %v340
    %v1116 = vunpack.c.l.b16 %v341
    %v1117 = vunpack.c.h.b16 %v341
    %v1118 = vunpack.c.l.b16 %v342
    %v1119 = vunpack.c.h.b16 %v342
    %v1120 = vunpack.c.l.b16 %v343
    %v1121 = vunpack.c.h.b16 %v343
    %v1122 = vunpack.c.l.b16 %v344
    %v1123 = vunpack.c.h.b16 %v344
    %v1124 = vunpack.c.l.b16 %v345
    %v1125 = vunpack.c.h.b16 %v345
    %v1126 = vunpack.c.l.b16 %v346
    %v1127 = vunpack.c.h.b16 %v346
    %v1128 = vunpack.c.l.b16 %v347
    %v1129 = vunpack.c.h.b16 %v347
    %v1130 = vunpack.c.l.b16 %v348
    %v1131 = vunpack.c.h.b16 %v348
    %v1132 = vunpack.c.l.b16 %v349
    %v1133 = vunpack.c.h.b16 %v349
    %v1134 = vunpack.c.l.b16 %v350
    %v1135 = vunpack.c.h.b16 %v350
    %v1136 = vunpack.c.l.b16 %v351
    %v1137 = vunpack.c.h.b16 %v351
    %v1138 = vunpack.c.l.b16 %v352
    %v1139 = vunpack.c.h.b16 %v352
    %v1140 = vunpack.c.l.b16 %v353
    %v1141 = vunpack.c.h.b16 %v353
    %v1142 = vunpack.c.l.b16 %v354
    %v1143 = vunpack.c.h.b16 %v354
    %v1144 = vunpack.c.l.b16 %v355
    %v1145 = vunpack.c.h.b16 %v355
    %v1146 = vpack.c.b16 %v638, %v634
    %v1147 = vpack.c.b16 %v639, %v635
    %v1148 = vpack.c.b16 %v640, %v636
    %v1149 = vpack.c.b16 %v641, %v637
    %v1150 = vpack.c.b16 %v646, %v642
    %v1151 = vpack.c.b16 %v647, %v643
    %v1152 = vpack.c.b16 %v648, %v644
    %v1153 = vpack.c.b16 %v649, %v645
    %v1154 = vpack.c.b16 %v654, %v650
    %v1155 = vpack.c.b16 %v655, %v651
    %v1156 = vpack.c.b16 %v656, %v652
    %v1157 = vpack.c.b16 %v657, %v653
    %v1158 = vpack.c.b16 %v662, %v658
    %v1159 = vpack.c.b16 %v663, %v659
    %v1160 = vpack.c.b16 %v664, %v660
    %v1161 = vpack.c.b16 %v665, %v661
    %v1162 = vpack.c.b16 %v670, %v666
    %v1163 = vpack.c.b16 %v671, %v667
    %v1164 = vpack.c.b16 %v672, %v668
    %v1165 = vpack.c.b16 %v673, %v669
    %v1166 = vpack.c.b16 %v678, %v674
    %v1167 = vpack.c.b16 %v679, %v675
    %v1168 = vpack.c.b16 %v680, %v676
    %v1169 = vpack.c.b16 %v681, %v677
    %v1170 = vpack.c.b16 %v686, %v682
    %v1171 = vpack.c.b16 %v687, %v683
    %v1172 = vpack.c.b16 %v688, %v684
    %v1173 = vpack.c.b16 %v689, %v685
    %v1174 = vpack.c.b16 %v694, %v690
    %v1175 = vpack.c.b16 %v695, %v691
    %v1176 = vpack.c.b16 %v696, %v692
    %v1177 = vpack.c.b16 %v697, %v693
    %v1178 = vpack.c.b16 %v702, %v698
    %v1179 = vpack.c.b16 %v703, %v699
    %v1180 = vpack.c.b16 %v704, %v700
    %v1181 = vpack.c.b16 %v705, %v701
    %v1182 = vpack.c.b16 %v710, %v706
    %v1183 = vpack.c.b16 %v711, %v707
    %v1184 = vpack.c.b16 %v712, %v708
    %v1185 = vpack.c.b16 %v713, %v709
    %v1186 = vpack.c.b16 %v718, %v714
    %v1187 = vpack.c.b16 %v719, %v715
    %v1188 = vpack.c.b16 %v720, %v716
    %v1189 = vpack.c.b16 %v721, %v717
    %v1190 = vpack.c.b16 %v726, %v722
    %v1191 = vpack.c.b16 %v727, %v723
    %v1192 = vpack.c.b16 %v728, %v724
    %v1193 = vpack.c.b16 %v729, %v725
    %v1194 = vpack.c.b16 %v734, %v730
    %v1195 = vpack.c.b16 %v735, %v731
    %v1196 = vpack.c.b16 %v736, %v732
    %v1197 = vpack.c.b16 %v737, %v733
    %v1198 = vpack.c.b16 %v742, %v738
    %v1199 = vpack.c.b16 %v743, %v739
    %v1200 = vpack.c.b16 %v744, %v740
    %v1201 = vpack.c.b16 %v745, %v741
    %v1202 = vpack.c.b16 %v750, %v746
    %v1203 = vpack.c.b16 %v751, %v747
    %v1204 = vpack.c.b16 %v752, %v748
    %v1205 = vpack.c.b16 %v753, %v749
    %v1206 = vpack.c.b16 %v758, %v754
    %v1207 = vpack.c.b16 %v759, %v755
    %v1208 = vpack.c.b16 %v760, %v756
    %v1209 = vpack.c.b16 %v761, %v757
    %v1210 = vpack.c.b16 %v766, %v762
    %v1211 = vpack.c.b16 %v767, %v763
    %v1212 = vpack.c.b16 %v768, %v764
    %v1213 = vpack.c.b16 %v769, %v765
    %v1214 = vpack.c.b16 %v774, %v770
    %v1215 = vpack.c.b16 %v775, %v771
    %v1216 = vpack.c.b16 %v776, %v772
    %v1217 = vpack.c.b16 %v777, %v773
    %v1218 = vpack.c.b16 %v782, %v778
    %v1219 = vpack.c.b16 %v783, %v779
    %v1220 = vpack.c.b16 %v784, %v780
    %v1221 = vpack.c.b16 %v785, %v781
    %v1222 = vpack.c.b16 %v790, %v786
    %v1223 = vpack.c.b16 %v791, %v787
    %v1224 = vpack.c.b16 %v792, %v788
    %v1225 = vpack.c.b16 %v793, %v789
    %v1226 = vpack.c.b16 %v798, %v794
    %v1227 = vpack.c.b16 %v799, %v795
    %v1228 = vpack.c.b16 %v800, %v796
    %v1229 = vpack.c.b16 %v801, %v797
    %v1230 = vpack.c.b16 %v806, %v802
    %v1231 = vpack.c.b16 %v807, %v803
    %v1232 = vpack.c.b16 %v808, %v804
    %v1233 = vpack.c.b16 %v809, %v805
    %v1234 = vpack.c.b16 %v814, %v810
    %v1235 = vpack.c.b16 %v815, %v811
    %v1236 = vpack.c.b16 %v816, %v812
    %v1237 = vpack.c.b16 %v817, %v813
    %v1238 = vpack.c.b16 %v822, %v818
    %v1239 = vpack.c.b16 %v823, %v819
    %v1240 = vpack.c.b16 %v824, %v820
    %v1241 = vpack.c.b16 %v825, %v821
    %v1242 = vpack.c.b16 %v830, %v826
    %v1243 = vpack.c.b16 %v831, %v827
    %v1244 = vpack.c.b16 %v832, %v828
    %v1245 = vpack.c.b16 %v833, %v829
    %v1246 = vpack.c.b16 %v838, %v834
    %v1247 = vpack.c.b16 %v839, %v835
    %v1248 = vpack.c.b16 %v840, %v836
    %v1249 = vpack.c.b16 %v841, %v837
    %v1250 = vpack.c.b16 %v846, %v842
    %v1251 = vpack.c.b16 %v847, %v843
    %v1252 = vpack.c.b16 %v848, %v844
    %v1253 = vpack.c.b16 %v849, %v845
    %v1254 = vpack.c.b16 %v854, %v850
    %v1255 = vpack.c.b16 %v855, %v851
    %v1256 = vpack.c.b16 %v856, %v852
    %v1257 = vpack.c.b16 %v857, %v853
    %v1258 = vpack.c.b16 %v862, %v858
    %v1259 = vpack.c.b16 %v863, %v859
    %v1260 = vpack.c.b16 %v864, %v860
    %v1261 = vpack.c.b16 %v865, %v861
    %v1262 = vpack.c.b16 %v870, %v866
    %v1263 = vpack.c.b16 %v871, %v867
    %v1264 = vpack.c.b16 %v872, %v868
    %v1265 = vpack.c.b16 %v873, %v869
    %v1266 = vpack.c.b16 %v878, %v874
    %v1267 = vpack.c.b16 %v879, %v875
    %v1268 = vpack.c.b16 %v880, %v876
    %v1269 = vpack.c.b16 %v881, %v877
    %v1270 = vpack.c.b16 %v886, %v882
    %v1271 = vpack.c.b16 %v887, %v883
    %v1272 = vpack.c.b16 %v888, %v884
    %v1273 = vpack.c.b16 %v889, %v885
    %v1274 = vpack.c.b16 %v894, %v890
    %v1275 = vpack.c.b16 %v895, %v891
    %v1276 = vpack.c.b16 %v896, %v892
    %v1277 = vpack.c.b16 %v897, %v893
    %v1278 = vpack.c.b16 %v902, %v898
    %v1279 = vpack.c.b16 %v903, %v899
    %v1280 = vpack.c.b16 %v904, %v900
    %v1281 = vpack.c.b16 %v905, %v901
    %v1282 = vpack.c.b16 %v910, %v906
    %v1283 = vpack.c.b16 %v911, %v907
    %v1284 = vpack.c.b16 %v912, %v908
    %v1285 = vpack.c.b16 %v913, %v909
    %v1286 = vpack.c.b16 %v918, %v914
    %v1287 = vpack.c.b16 %v919, %v915
    %v1288 = vpack.c.b16 %v920, %v916
    %v1289 = vpack.c.b16 %v921, %v917
    %v1290 = vpack.c.b16 %v926, %v922
    %v1291 = vpack.c.b16 %v927, %v923
    %v1292 = vpack.c.b16 %v928, %v924
    %v1293 = vpack.c.b16 %v929, %v925
    %v1294 = vpack.c.b16 %v934, %v930
    %v1295 = vpack.c.b16 %v935, %v931
    %v1296 = vpack.c.b16 %v936, %v932
    %v1297 = vpack.c.b16 %v937, %v933
    %v1298 = vpack.c.b16 %v942, %v938
    %v1299 = vpack.c.b16 %v943, %v939
    %v1300 = vpack.c.b16 %v944, %v940
    %v1301 = vpack.c.b16 %v945, %v941
    %v1302 = vpack.c.b16 %v950, %v946
    %v1303 = vpack.c.b16 %v951, %v947
    %v1304 = vpack.c.b16 %v952, %v948
    %v1305 = vpack.c.b16 %v953, %v949
    %v1306 = vpack.c.b16 %v958, %v954
    %v1307 = vpack.c.b16 %v959, %v955
    %v1308 = vpack.c.b16 %v960, %v956
    %v1309 = vpack.c.b16 %v961, %v957
    %v1310 = vpack.c.b16 %v966, %v962
    %v1311 = vpack.c.b16 %v967, %v963
    %v1312 = vpack.c.b16 %v968, %v964
    %v1313 = vpack.c.b16 %v969, %v965
    %v1314 = vpack.c.b16 %v974, %v970
    %v1315 = vpack.c.b16 %v975, %v971
    %v1316 = vpack.c.b16 %v976, %v972
    %v1317 = vpack.c.b16 %v977, %v973
    %v1318 = vpack.c.b16 %v982, %v978
    %v1319 = vpack.c.b16 %v983, %v979
    %v1320 = vpack.c.b16 %v984, %v980
    %v1321 = vpack.c.b16 %v985, %v981
    %v1322 = vpack.c.b16 %v990, %v986
    %v1323 = vpack.c.b16 %v991, %v987
    %v1324 = vpack.c.b16 %v992, %v988
    %v1325 = vpack.c.b16 %v993, %v989
    %v1326 = vpack.c.b16 %v998, %v994
    %v1327 = vpack.c.b16 %v999, %v995
    %v1328 = vpack.c.b16 %v1000, %v996
    %v1329 = vpack.c.b16 %v1001, %v997
    %v1330 = vpack.c.b16 %v1006, %v1002
    %v1331 = vpack.c.b16 %v1007, %v1003
    %v1332 = vpack.c.b16 %v1008, %v1004
    %v1333 = vpack.c.b16 %v1009, %v1005
    %v1334 = vpack.c.b16 %v1014, %v1010
    %v1335 = vpack.c.b16 %v1015, %v1011
    %v1336 = vpack.c.b16 %v1016, %v1012
    %v1337 = vpack.c.b16 %v1017, %v1013
    %v1338 = vpack.c.b16 %v1022, %v1018
    %v1339 = vpack.c.b16 %v1023, %v1019
    %v1340 = vpack.c.b16 %v1024, %v1020
    %v1341 = vpack.c.b16 %v1025, %v1021
    %v1342 = vpack.c.b16 %v1030, %v1026
    %v1343 = vpack.c.b16 %v1031, %v1027
    %v1344 = vpack.c.b16 %v1032, %v1028
    %v1345 = vpack.c.b16 %v1033, %v1029
    %v1346 = vpack.c.b16 %v1038, %v1034
    %v1347 = vpack.c.b16 %v1039, %v1035
    %v1348 = vpack.c.b16 %v1040, %v1036
    %v1349 = vpack.c.b16 %v1041, %v1037
    %v1350 = vpack.c.b16 %v1046, %v1042
    %v1351 = vpack.c.b16 %v1047, %v1043
    %v1352 = vpack.c.b16 %v1048, %v1044
    %v1353 = vpack.c.b16 %v1049, %v1045
    %v1354 = vpack.c.b16 %v1054, %v1050
    %v1355 = vpack.c.b16 %v1055, %v1051
    %v1356 = vpack.c.b16 %v1056, %v1052
    %v1357 = vpack.c.b16 %v1057, %v1053
    %v1358 = vpack.c.b16 %v1062, %v1058
    %v1359 = vpack.c.b16 %v1063, %v1059
    %v1360 = vpack.c.b16 %v1064, %v1060
    %v1361 = vpack.c.b16 %v1065, %v1061
    %v1362 = vpack.c.b16 %v1070, %v1066
    %v1363 = vpack.c.b16 %v1071, %v1067
    %v1364 = vpack.c.b16 %v1072, %v1068
    %v1365 = vpack.c.b16 %v1073, %v1069
    %v1366 = vpack.c.b16 %v1078, %v1074
    %v1367 = vpack.c.b16 %v1079, %v1075
    %v1368 = vpack.c.b16 %v1080, %v1076
    %v1369 = vpack.c.b16 %v1081, %v1077
    %v1370 = vpack.c.b16 %v1086, %v1082
    %v1371 = vpack.c.b16 %v1087, %v1083
    %v1372 = vpack.c.b16 %v1088, %v1084
    %v1373 = vpack.c.b16 %v1089, %v1085
    %v1374 = vpack.c.b16 %v1094, %v1090
    %v1375 = vpack.c.b16 %v1095, %v1091
    %v1376 = vpack.c.b16 %v1096, %v1092
    %v1377 = vpack.c.b16 %v1097, %v1093
    %v1378 = vpack.c.b16 %v1102, %v1098
    %v1379 = vpack.c.b16 %v1103, %v1099
    %v1380 = vpack.c.b16 %v1104, %v1100
    %v1381 = vpack.c.b16 %v1105, %v1101
    %v1382 = vpack.c.b16 %v1110, %v1106
    %v1383 = vpack.c.b16 %v1111, %v1107
    %v1384 = vpack.c.b16 %v1112, %v1108
    %v1385 = vpack.c.b16 %v1113, %v1109
    %v1386 = vpack.c.b16 %v1118, %v1114
    %v1387 = vpack.c.b16 %v1119, %v1115
    %v1388 = vpack.c.b16 %v1120, %v1116
    %v1389 = vpack.c.b16 %v1121, %v1117
    %v1390 = vpack.c.b16 %v1126, %v1122
    %v1391 = vpack.c.b16 %v1127, %v1123
    %v1392 = vpack.c.b16 %v1128, %v1124
    %v1393 = vpack.c.b16 %v1129, %v1125
    %v1394 = vpack.c.b16 %v1134, %v1130
    %v1395 = vpack.c.b16 %v1135, %v1131
    %v1396 = vpack.c.b16 %v1136, %v1132
    %v1397 = vpack.c.b16 %v1137, %v1133
    %v1398 = vpack.c.b16 %v1142, %v1138
    %v1399 = vpack.c.b16 %v1143, %v1139
    %v1400 = vpack.c.b16 %v1144, %v1140
    %v1401 = vpack.c.b16 %v1145, %v1141
    %1658 = vmatprep.subr.bf16.mxu0 %v1147
    %1659 = vmatpush1.bf16.msra.mxu0 %v1146
    %1660 = vmatprep.subr.bf16.mxu0 %v1151
    %1661 = vmatpush1.bf16.msra.mxu0 %v1150
    %1662 = vmatprep.subr.bf16.mxu0 %v1155
    %1663 = vmatpush1.bf16.msra.mxu0 %v1154
    %1664 = vmatprep.subr.bf16.mxu0 %v1159
    %1665 = vmatpush1.bf16.msra.mxu0 %v1158
    %1666 = vmatprep.subr.bf16.mxu0 %v1163
    %1667 = vmatpush1.bf16.msra.mxu0 %v1162
    %1668 = vmatprep.subr.bf16.mxu0 %v1167
    %1669 = vmatpush1.bf16.msra.mxu0 %v1166
    %1670 = vmatprep.subr.bf16.mxu0 %v1171
    %1671 = vmatpush1.bf16.msra.mxu0 %v1170
    %1672 = vmatprep.subr.bf16.mxu0 %v1175
    %1673 = vmatpush1.bf16.msra.mxu0 %v1174
    %1674 = vmatprep.subr.bf16.mxu0 %v1179
    %1675 = vmatpush1.bf16.msra.mxu0 %v1178
    %1676 = vmatprep.subr.bf16.mxu0 %v1183
    %1677 = vmatpush1.bf16.msra.mxu0 %v1182
    %1678 = vmatprep.subr.bf16.mxu0 %v1187
    %1679 = vmatpush1.bf16.msra.mxu0 %v1186
    %1680 = vmatprep.subr.bf16.mxu0 %v1191
    %1681 = vmatpush1.bf16.msra.mxu0 %v1190
    %1682 = vmatprep.subr.bf16.mxu0 %v1195
    %1683 = vmatpush1.bf16.msra.mxu0 %v1194
    %1684 = vmatprep.subr.bf16.mxu0 %v1199
    %1685 = vmatpush1.bf16.msra.mxu0 %v1198
    %1686 = vmatprep.subr.bf16.mxu0 %v1203
    %1687 = vmatpush1.bf16.msra.mxu0 %v1202
    %1688 = vmatprep.subr.bf16.mxu0 %v1207
    %1689 = vmatpush1.bf16.msra.mxu0 %v1206
    %1690 = vmatprep.mubr.bf16.mxu0 %v93
    %1691 = vmatmul.mubr.bf16.gmra.mrb[0].mxu0 %v92
    %v1692 = vpop.f32.mrb[0].mxu0
    %v1693 = vadd.f32 %v361, %v1692
    %v1694 = vpop.f32.mrb[0].mxu0
    %v1695 = vadd.f32 %v365, %v1694
    %v1696 = vpop.f32.mrb[0].mxu0
    %v1697 = vpop.f32.mrb[0].mxu0
    %1698 = vdwg.mxu0
    %1699 = vmatprep.subr.bf16.mxu0 %v1211
    %1700 = vmatpush1.bf16.msra.mxu0 %v1210
    %1701 = vmatprep.subr.bf16.mxu0 %v1215
    %1702 = vmatpush1.bf16.msra.mxu0 %v1214
    %1703 = vmatprep.subr.bf16.mxu0 %v1219
    %1704 = vmatpush1.bf16.msra.mxu0 %v1218
    %1705 = vmatprep.subr.bf16.mxu0 %v1223
    %1706 = vmatpush1.bf16.msra.mxu0 %v1222
    %1707 = vmatprep.subr.bf16.mxu0 %v1227
    %1708 = vmatpush1.bf16.msra.mxu0 %v1226
    %1709 = vmatprep.subr.bf16.mxu0 %v1231
    %1710 = vmatpush1.bf16.msra.mxu0 %v1230
    %1711 = vmatprep.subr.bf16.mxu0 %v1235
    %1712 = vmatpush1.bf16.msra.mxu0 %v1234
    %1713 = vmatprep.subr.bf16.mxu0 %v1239
    %1714 = vmatpush1.bf16.msra.mxu0 %v1238
    %1715 = vmatprep.subr.bf16.mxu0 %v1243
    %1716 = vmatpush1.bf16.msra.mxu0 %v1242
    %1717 = vmatprep.subr.bf16.mxu0 %v1247
    %1718 = vmatpush1.bf16.msra.mxu0 %v1246
    %1719 = vmatprep.subr.bf16.mxu0 %v1251
    %1720 = vmatpush1.bf16.msra.mxu0 %v1250
    %1721 = vmatprep.subr.bf16.mxu0 %v1255
    %1722 = vmatpush1.bf16.msra.mxu0 %v1254
    %1723 = vmatprep.subr.bf16.mxu0 %v1259
    %1724 = vmatpush1.bf16.msra.mxu0 %v1258
    %1725 = vmatprep.subr.bf16.mxu0 %v1263
    %1726 = vmatpush1.bf16.msra.mxu0 %v1262
    %1727 = vmatprep.subr.bf16.mxu0 %v1267
    %1728 = vmatpush1.bf16.msra.mxu0 %v1266
    %1729 = vmatprep.subr.bf16.mxu0 %v1271
    %1730 = vmatpush1.bf16.msra.mxu0 %v1270
    %1731 = vmatprep.mubr.bf16.mxu0 %v95
    %1732 = vmatmul.mubr.bf16.gmra.mrb[0].mxu0 %v94
    %v1733 = vpop.f32.mrb[0].mxu0
    %v1734 = vadd.f32 %v1693, %v1733
    %v1735 = vpop.f32.mrb[0].mxu0
    %v1736 = vadd.f32 %v1695, %v1735
    %v1737 = vpop.f32.mrb[0].mxu0
    %v1738 = vpop.f32.mrb[0].mxu0
    %1739 = vdwg.mxu0
    %1740 = vmatprep.subr.bf16.mxu0 %v1275
    %1741 = vmatpush1.bf16.msra.mxu0 %v1274
    %1742 = vmatprep.subr.bf16.mxu0 %v1279
    %1743 = vmatpush1.bf16.msra.mxu0 %v1278
    %1744 = vmatprep.subr.bf16.mxu0 %v1283
    %1745 = vmatpush1.bf16.msra.mxu0 %v1282
    %1746 = vmatprep.subr.bf16.mxu0 %v1287
    %1747 = vmatpush1.bf16.msra.mxu0 %v1286
    %1748 = vmatprep.subr.bf16.mxu0 %v1291
    %1749 = vmatpush1.bf16.msra.mxu0 %v1290
    %1750 = vmatprep.subr.bf16.mxu0 %v1295
    %1751 = vmatpush1.bf16.msra.mxu0 %v1294
    %1752 = vmatprep.subr.bf16.mxu0 %v1299
    %1753 = vmatpush1.bf16.msra.mxu0 %v1298
    %1754 = vmatprep.subr.bf16.mxu0 %v1303
    %1755 = vmatpush1.bf16.msra.mxu0 %v1302
    %1756 = vmatprep.subr.bf16.mxu0 %v1307
    %1757 = vmatpush1.bf16.msra.mxu0 %v1306
    %1758 = vmatprep.subr.bf16.mxu0 %v1311
    %1759 = vmatpush1.bf16.msra.mxu0 %v1310
    %1760 = vmatprep.subr.bf16.mxu0 %v1315
    %1761 = vmatpush1.bf16.msra.mxu0 %v1314
    %1762 = vmatprep.subr.bf16.mxu0 %v1319
    %1763 = vmatpush1.bf16.msra.mxu0 %v1318
    %1764 = vmatprep.subr.bf16.mxu0 %v1323
    %1765 = vmatpush1.bf16.msra.mxu0 %v1322
    %1766 = vmatprep.subr.bf16.mxu0 %v1327
    %1767 = vmatpush1.bf16.msra.mxu0 %v1326
    %1768 = vmatprep.subr.bf16.mxu0 %v1331
    %1769 = vmatpush1.bf16.msra.mxu0 %v1330
    %1770 = vmatprep.subr.bf16.mxu0 %v1335
    %1771 = vmatpush1.bf16.msra.mxu0 %v1334
    %1772 = vmatprep.mubr.bf16.mxu0 %v97
    %1773 = vmatmul.mubr.bf16.gmra.mrb[0].mxu0 %v96
    %v1774 = vpop.f32.mrb[0].mxu0
    %v1775 = vadd.f32 %v1734, %v1774
    %v1776 = vpop.f32.mrb[0].mxu0
    %v1777 = vadd.f32 %v1736, %v1776
    %v1778 = vpop.f32.mrb[0].mxu0
    %v1779 = vpop.f32.mrb[0].mxu0
    %1780 = vdwg.mxu0
    %1781 = vmatprep.subr.bf16.mxu0 %v1339
    %1782 = vmatpush1.bf16.msra.mxu0 %v1338
    %1783 = vmatprep.subr.bf16.mxu0 %v1343
    %1784 = vmatpush1.bf16.msra.mxu0 %v1342
    %1785 = vmatprep.subr.bf16.mxu0 %v1347
    %1786 = vmatpush1.bf16.msra.mxu0 %v1346
    %1787 = vmatprep.subr.bf16.mxu0 %v1351
    %1788 = vmatpush1.bf16.msra.mxu0 %v1350
    %1789 = vmatprep.subr.bf16.mxu0 %v1355
    %1790 = vmatpush1.bf16.msra.mxu0 %v1354
    %1791 = vmatprep.subr.bf16.mxu0 %v1359
    %1792 = vmatpush1.bf16.msra.mxu0 %v1358
    %1793 = vmatprep.subr.bf16.mxu0 %v1363
    %1794 = vmatpush1.bf16.msra.mxu0 %v1362
    %1795 = vmatprep.subr.bf16.mxu0 %v1367
    %1796 = vmatpush1.bf16.msra.mxu0 %v1366
    %1797 = vmatprep.subr.bf16.mxu0 %v1371
    %1798 = vmatpush1.bf16.msra.mxu0 %v1370
    %1799 = vmatprep.subr.bf16.mxu0 %v1375
    %1800 = vmatpush1.bf16.msra.mxu0 %v1374
    %1801 = vmatprep.subr.bf16.mxu0 %v1379
    %1802 = vmatpush1.bf16.msra.mxu0 %v1378
    %1803 = vmatprep.subr.bf16.mxu0 %v1383
    %1804 = vmatpush1.bf16.msra.mxu0 %v1382
    %1805 = vmatprep.subr.bf16.mxu0 %v1387
    %1806 = vmatpush1.bf16.msra.mxu0 %v1386
    %1807 = vmatprep.subr.bf16.mxu0 %v1391
    %1808 = vmatpush1.bf16.msra.mxu0 %v1390
    %1809 = vmatprep.subr.bf16.mxu0 %v1395
    %1810 = vmatpush1.bf16.msra.mxu0 %v1394
    %1811 = vmatprep.subr.bf16.mxu0 %v1399
    %1812 = vmatpush1.bf16.msra.mxu0 %v1398
    %1813 = vmatprep.mubr.bf16.mxu0 %v99
    %1814 = vmatmul.mubr.bf16.gmra.mrb[0].mxu0 %v98
    %v1815 = vpop.f32.mrb[0].mxu0
    %v1816 = vadd.f32 %v1775, %v1815
    %v1817 = vpop.f32.mrb[0].mxu0
    %v1818 = vadd.f32 %v1777, %v1817
    %v1819 = vpop.f32.mrb[0].mxu0
    %v1820 = vpop.f32.mrb[0].mxu0
    %1821 = vdwg.mxu0
    %1822 = vmatprep.subr.bf16.mxu0 %v1149
    %1823 = vmatpush1.bf16.msra.mxu0 %v1148
    %1824 = vmatprep.subr.bf16.mxu0 %v1153
    %1825 = vmatpush1.bf16.msra.mxu0 %v1152
    %1826 = vmatprep.subr.bf16.mxu0 %v1157
    %1827 = vmatpush1.bf16.msra.mxu0 %v1156
    %1828 = vmatprep.subr.bf16.mxu0 %v1161
    %1829 = vmatpush1.bf16.msra.mxu0 %v1160
    %1830 = vmatprep.subr.bf16.mxu0 %v1165
    %1831 = vmatpush1.bf16.msra.mxu0 %v1164
    %1832 = vmatprep.subr.bf16.mxu0 %v1169
    %1833 = vmatpush1.bf16.msra.mxu0 %v1168
    %1834 = vmatprep.subr.bf16.mxu0 %v1173
    %1835 = vmatpush1.bf16.msra.mxu0 %v1172
    %1836 = vmatprep.subr.bf16.mxu0 %v1177
    %1837 = vmatpush1.bf16.msra.mxu0 %v1176
    %1838 = vmatprep.subr.bf16.mxu0 %v1181
    %1839 = vmatpush1.bf16.msra.mxu0 %v1180
    %1840 = vmatprep.subr.bf16.mxu0 %v1185
    %1841 = vmatpush1.bf16.msra.mxu0 %v1184
    %1842 = vmatprep.subr.bf16.mxu0 %v1189
    %1843 = vmatpush1.bf16.msra.mxu0 %v1188
    %1844 = vmatprep.subr.bf16.mxu0 %v1193
    %1845 = vmatpush1.bf16.msra.mxu0 %v1192
    %1846 = vmatprep.subr.bf16.mxu0 %v1197
    %1847 = vmatpush1.bf16.msra.mxu0 %v1196
    %1848 = vmatprep.subr.bf16.mxu0 %v1201
    %1849 = vmatpush1.bf16.msra.mxu0 %v1200
    %1850 = vmatprep.subr.bf16.mxu0 %v1205
    %1851 = vmatpush1.bf16.msra.mxu0 %v1204
    %1852 = vmatprep.subr.bf16.mxu0 %v1209
    %1853 = vmatpush1.bf16.msra.mxu0 %v1208
    %1854 = vmatprep.mubr.bf16.mxu0 %v93
    %1855 = vmatmul.mubr.bf16.gmra.mrb[0].mxu0 %v92
    %v1856 = vpop.f32.mrb[0].mxu0
    %v1857 = vadd.f32 %v369, %v1856
    %v1858 = vpop.f32.mrb[0].mxu0
    %v1859 = vadd.f32 %v373, %v1858
    %v1860 = vpop.f32.mrb[0].mxu0
    %v1861 = vpop.f32.mrb[0].mxu0
    %1862 = vdwg.mxu0
    %1863 = vmatprep.subr.bf16.mxu0 %v1213
    %1864 = vmatpush1.bf16.msra.mxu0 %v1212
    %1865 = vmatprep.subr.bf16.mxu0 %v1217
    %1866 = vmatpush1.bf16.msra.mxu0 %v1216
    %1867 = vmatprep.subr.bf16.mxu0 %v1221
    %1868 = vmatpush1.bf16.msra.mxu0 %v1220
    %1869 = vmatprep.subr.bf16.mxu0 %v1225
    %1870 = vmatpush1.bf16.msra.mxu0 %v1224
    %1871 = vmatprep.subr.bf16.mxu0 %v1229
    %1872 = vmatpush1.bf16.msra.mxu0 %v1228
    %1873 = vmatprep.subr.bf16.mxu0 %v1233
    %1874 = vmatpush1.bf16.msra.mxu0 %v1232
    %1875 = vmatprep.subr.bf16.mxu0 %v1237
    %1876 = vmatpush1.bf16.msra.mxu0 %v1236
    %1877 = vmatprep.subr.bf16.mxu0 %v1241
    %1878 = vmatpush1.bf16.msra.mxu0 %v1240
    %1879 = vmatprep.subr.bf16.mxu0 %v1245
    %1880 = vmatpush1.bf16.msra.mxu0 %v1244
    %1881 = vmatprep.subr.bf16.mxu0 %v1249
    %1882 = vmatpush1.bf16.msra.mxu0 %v1248
    %1883 = vmatprep.subr.bf16.mxu0 %v1253
    %1884 = vmatpush1.bf16.msra.mxu0 %v1252
    %1885 = vmatprep.subr.bf16.mxu0 %v1257
    %1886 = vmatpush1.bf16.msra.mxu0 %v1256
    %1887 = vmatprep.subr.bf16.mxu0 %v1261
    %1888 = vmatpush1.bf16.msra.mxu0 %v1260
    %1889 = vmatprep.subr.bf16.mxu0 %v1265
    %1890 = vmatpush1.bf16.msra.mxu0 %v1264
    %1891 = vmatprep.subr.bf16.mxu0 %v1269
    %1892 = vmatpush1.bf16.msra.mxu0 %v1268
    %1893 = vmatprep.subr.bf16.mxu0 %v1273
    %1894 = vmatpush1.bf16.msra.mxu0 %v1272
    %1895 = vmatprep.mubr.bf16.mxu0 %v95
    %1896 = vmatmul.mubr.bf16.gmra.mrb[0].mxu0 %v94
    %v1897 = vpop.f32.mrb[0].mxu0
    %v1898 = vadd.f32 %v1857, %v1897
    %v1899 = vpop.f32.mrb[0].mxu0
    %v1900 = vadd.f32 %v1859, %v1899
    %v1901 = vpop.f32.mrb[0].mxu0
    %v1902 = vpop.f32.mrb[0].mxu0
    %1903 = vdwg.mxu0
    %1904 = vmatprep.subr.bf16.mxu0 %v1277
    %1905 = vmatpush1.bf16.msra.mxu0 %v1276
    %1906 = vmatprep.subr.bf16.mxu0 %v1281
    %1907 = vmatpush1.bf16.msra.mxu0 %v1280
    %1908 = vmatprep.subr.bf16.mxu0 %v1285
    %1909 = vmatpush1.bf16.msra.mxu0 %v1284
    %1910 = vmatprep.subr.bf16.mxu0 %v1289
    %1911 = vmatpush1.bf16.msra.mxu0 %v1288
    %1912 = vmatprep.subr.bf16.mxu0 %v1293
    %1913 = vmatpush1.bf16.msra.mxu0 %v1292
    %1914 = vmatprep.subr.bf16.mxu0 %v1297
    %1915 = vmatpush1.bf16.msra.mxu0 %v1296
    %1916 = vmatprep.subr.bf16.mxu0 %v1301
    %1917 = vmatpush1.bf16.msra.mxu0 %v1300
    %1918 = vmatprep.subr.bf16.mxu0 %v1305
    %1919 = vmatpush1.bf16.msra.mxu0 %v1304
    %1920 = vmatprep.subr.bf16.mxu0 %v1309
    %1921 = vmatpush1.bf16.msra.mxu0 %v1308
    %1922 = vmatprep.subr.bf16.mxu0 %v1313
    %1923 = vmatpush1.bf16.msra.mxu0 %v1312
    %1924 = vmatprep.subr.bf16.mxu0 %v1317
    %1925 = vmatpush1.bf16.msra.mxu0 %v1316
    %1926 = vmatprep.subr.bf16.mxu0 %v1321
    %1927 = vmatpush1.bf16.msra.mxu0 %v1320
    %1928 = vmatprep.subr.bf16.mxu0 %v1325
    %1929 = vmatpush1.bf16.msra.mxu0 %v1324
    %1930 = vmatprep.subr.bf16.mxu0 %v1329
    %1931 = vmatpush1.bf16.msra.mxu0 %v1328
    %1932 = vmatprep.subr.bf16.mxu0 %v1333
    %1933 = vmatpush1.bf16.msra.mxu0 %v1332
    %1934 = vmatprep.subr.bf16.mxu0 %v1337
    %1935 = vmatpush1.bf16.msra.mxu0 %v1336
    %1936 = vmatprep.mubr.bf16.mxu0 %v97
    %1937 = vmatmul.mubr.bf16.gmra.mrb[0].mxu0 %v96
    %v1938 = vpop.f32.mrb[0].mxu0
    %v1939 = vadd.f32 %v1898, %v1938
    %v1940 = vpop.f32.mrb[0].mxu0
    %v1941 = vadd.f32 %v1900, %v1940
    %v1942 = vpop.f32.mrb[0].mxu0
    %v1943 = vpop.f32.mrb[0].mxu0
    %1944 = vdwg.mxu0
    %1945 = vmatprep.subr.bf16.mxu0 %v1341
    %1946 = vmatpush1.bf16.msra.mxu0 %v1340
    %1947 = vmatprep.subr.bf16.mxu0 %v1345
    %1948 = vmatpush1.bf16.msra.mxu0 %v1344
    %1949 = vmatprep.subr.bf16.mxu0 %v1349
    %1950 = vmatpush1.bf16.msra.mxu0 %v1348
    %1951 = vmatprep.subr.bf16.mxu0 %v1353
    %1952 = vmatpush1.bf16.msra.mxu0 %v1352
    %1953 = vmatprep.subr.bf16.mxu0 %v1357
    %1954 = vmatpush1.bf16.msra.mxu0 %v1356
    %1955 = vmatprep.subr.bf16.mxu0 %v1361
    %1956 = vmatpush1.bf16.msra.mxu0 %v1360
    %1957 = vmatprep.subr.bf16.mxu0 %v1365
    %1958 = vmatpush1.bf16.msra.mxu0 %v1364
    %1959 = vmatprep.subr.bf16.mxu0 %v1369
    %1960 = vmatpush1.bf16.msra.mxu0 %v1368
    %1961 = vmatprep.subr.bf16.mxu0 %v1373
    %1962 = vmatpush1.bf16.msra.mxu0 %v1372
    %1963 = vmatprep.subr.bf16.mxu0 %v1377
    %1964 = vmatpush1.bf16.msra.mxu0 %v1376
    %1965 = vmatprep.subr.bf16.mxu0 %v1381
    %1966 = vmatpush1.bf16.msra.mxu0 %v1380
    %1967 = vmatprep.subr.bf16.mxu0 %v1385
    %1968 = vmatpush1.bf16.msra.mxu0 %v1384
    %1969 = vmatprep.subr.bf16.mxu0 %v1389
    %1970 = vmatpush1.bf16.msra.mxu0 %v1388
    %1971 = vmatprep.subr.bf16.mxu0 %v1393
    %1972 = vmatpush1.bf16.msra.mxu0 %v1392
    %1973 = vmatprep.subr.bf16.mxu0 %v1397
    %1974 = vmatpush1.bf16.msra.mxu0 %v1396
    %1975 = vmatprep.subr.bf16.mxu0 %v1401
    %1976 = vmatpush1.bf16.msra.mxu0 %v1400
    %1977 = vmatprep.mubr.bf16.mxu0 %v99
    %1978 = vmatmul.mubr.bf16.gmra.mrb[0].mxu0 %v98
    %v1979 = vpop.f32.mrb[0].mxu0
    %v1980 = vadd.f32 %v1939, %v1979
    %v1981 = vpop.f32.mrb[0].mxu0
    %v1982 = vadd.f32 %v1941, %v1981
    %v1983 = vpop.f32.mrb[0].mxu0
    %v1984 = vpop.f32.mrb[0].mxu0
    %1985 = vdwg.mxu0
    %v1986 = vmax.f32 %v1816, 0.0
    %v1987 = vmax.f32 %v1818, 0.0
    %v1988 = vmax.f32 %v1980, 0.0
    %v1989 = vmax.f32 %v1982, 0.0
    %v1990 = vpack.c.bf16 %v1986, %v1986
    %v1991 = vpack.c.bf16 %v1987, %v1987
    %v1992 = vpack.c.bf16 %v1988, %v1988
    %v1993 = vpack.c.bf16 %v1989, %v1989
    %v1994 = vld [vmem:[#allocation7] sm:$0xff]
    %v1995 = vld [vmem:[#allocation7 + $0x8] sm:$0xff]
    %v1996 = vld [vmem:[#allocation7 + $0x10] sm:$0xff]
    %v1997 = vld [vmem:[#allocation7 + $0x18] sm:$0xff]
    %v1998 = vld [vmem:[#allocation7 + $0x20] sm:$0xff]
    %v1999 = vld [vmem:[#allocation7 + $0x28] sm:$0xff]
    %v2000 = vld [vmem:[#allocation7 + $0x30] sm:$0xff]
    %v2001 = vld [vmem:[#allocation7 + $0x38] sm:$0xff]
    %v2002 = vld [vmem:[#allocation7 + $0x40] sm:$0xff]
    %v2003 = vld [vmem:[#allocation7 + $0x48] sm:$0xff]
    %v2004 = vld [vmem:[#allocation7 + $0x50] sm:$0xff]
    %v2005 = vld [vmem:[#allocation7 + $0x58] sm:$0xff]
    %v2006 = vld [vmem:[#allocation7 + $0x60] sm:$0xff]
    %v2007 = vld [vmem:[#allocation7 + $0x68] sm:$0xff]
    %v2008 = vld [vmem:[#allocation7 + $0x70] sm:$0xff]
    %v2009 = vld [vmem:[#allocation7 + $0x78] sm:$0xff]
    %v2010 = vld [vmem:[#allocation7 + $0x80] sm:$0xff]
    %v2011 = vld [vmem:[#allocation7 + $0x88] sm:$0xff]
    %v2012 = vld [vmem:[#allocation7 + $0x90] sm:$0xff]
    %v2013 = vld [vmem:[#allocation7 + $0x98] sm:$0xff]
    %v2014 = vld [vmem:[#allocation7 + $0xa0] sm:$0xff]
    %v2015 = vld [vmem:[#allocation7 + $0xa8] sm:$0xff]
    %v2016 = vld [vmem:[#allocation7 + $0xb0] sm:$0xff]
    %v2017 = vld [vmem:[#allocation7 + $0xb8] sm:$0xff]
    %v2018 = vld [vmem:[#allocation7 + $0xc0] sm:$0xff]
    %v2019 = vld [vmem:[#allocation7 + $0xc8] sm:$0xff]
    %v2020 = vld [vmem:[#allocation7 + $0xd0] sm:$0xff]
    %v2021 = vld [vmem:[#allocation7 + $0xd8] sm:$0xff]
    %v2022 = vld [vmem:[#allocation7 + $0xe0] sm:$0xff]
    %v2023 = vld [vmem:[#allocation7 + $0xe8] sm:$0xff]
    %v2024 = vld [vmem:[#allocation7 + $0xf0] sm:$0xff]
    %v2025 = vld [vmem:[#allocation7 + $0xf8] sm:$0xff]
    %v2026 = vld [vmem:[#allocation7 + $0x100] sm:$0xff]
    %v2027 = vld [vmem:[#allocation7 + $0x108] sm:$0xff]
    %v2028 = vld [vmem:[#allocation7 + $0x110] sm:$0xff]
    %v2029 = vld [vmem:[#allocation7 + $0x118] sm:$0xff]
    %v2030 = vld [vmem:[#allocation7 + $0x120] sm:$0xff]
    %v2031 = vld [vmem:[#allocation7 + $0x128] sm:$0xff]
    %v2032 = vld [vmem:[#allocation7 + $0x130] sm:$0xff]
    %v2033 = vld [vmem:[#allocation7 + $0x138] sm:$0xff]
    %v2034 = vld [vmem:[#allocation7 + $0x140] sm:$0xff]
    %v2035 = vld [vmem:[#allocation7 + $0x148] sm:$0xff]
    %v2036 = vld [vmem:[#allocation7 + $0x150] sm:$0xff]
    %v2037 = vld [vmem:[#allocation7 + $0x158] sm:$0xff]
    %v2038 = vld [vmem:[#allocation7 + $0x160] sm:$0xff]
    %v2039 = vld [vmem:[#allocation7 + $0x168] sm:$0xff]
    %v2040 = vld [vmem:[#allocation7 + $0x170] sm:$0xff]
    %v2041 = vld [vmem:[#allocation7 + $0x178] sm:$0xff]
    %v2042 = vld [vmem:[#allocation7 + $0x180] sm:$0xff]
    %v2043 = vld [vmem:[#allocation7 + $0x188] sm:$0xff]
    %v2044 = vld [vmem:[#allocation7 + $0x190] sm:$0xff]
    %v2045 = vld [vmem:[#allocation7 + $0x198] sm:$0xff]
    %v2046 = vld [vmem:[#allocation7 + $0x1a0] sm:$0xff]
    %v2047 = vld [vmem:[#allocation7 + $0x1a8] sm:$0xff]
    %v2048 = vld [vmem:[#allocation7 + $0x1b0] sm:$0xff]
    %v2049 = vld [vmem:[#allocation7 + $0x1b8] sm:$0xff]
    %v2050 = vld [vmem:[#allocation7 + $0x1c0] sm:$0xff]
    %v2051 = vld [vmem:[#allocation7 + $0x1c8] sm:$0xff]
    %v2052 = vld [vmem:[#allocation7 + $0x1d0] sm:$0xff]
    %v2053 = vld [vmem:[#allocation7 + $0x1d8] sm:$0xff]
    %v2054 = vld [vmem:[#allocation7 + $0x1e0] sm:$0xff]
    %v2055 = vld [vmem:[#allocation7 + $0x1e8] sm:$0xff]
    %v2056 = vld [vmem:[#allocation7 + $0x1f0] sm:$0xff]
    %v2057 = vld [vmem:[#allocation7 + $0x1f8] sm:$0xff]
    %v2058 = vld [vmem:[#allocation7 + $0x200] sm:$0xff]
    %v2059 = vld [vmem:[#allocation7 + $0x208] sm:$0xff]
    %v2060 = vld [vmem:[#allocation7 + $0x210] sm:$0xff]
    %v2061 = vld [vmem:[#allocation7 + $0x218] sm:$0xff]
    %v2062 = vld [vmem:[#allocation7 + $0x220] sm:$0xff]
    %v2063 = vld [vmem:[#allocation7 + $0x228] sm:$0xff]
    %v2064 = vld [vmem:[#allocation7 + $0x230] sm:$0xff]
    %v2065 = vld [vmem:[#allocation7 + $0x238] sm:$0xff]
    %v2066 = vld [vmem:[#allocation7 + $0x240] sm:$0xff]
    %v2067 = vld [vmem:[#allocation7 + $0x248] sm:$0xff]
    %v2068 = vld [vmem:[#allocation7 + $0x250] sm:$0xff]
    %v2069 = vld [vmem:[#allocation7 + $0x258] sm:$0xff]
    %v2070 = vld [vmem:[#allocation7 + $0x260] sm:$0xff]
    %v2071 = vld [vmem:[#allocation7 + $0x268] sm:$0xff]
    %v2072 = vld [vmem:[#allocation7 + $0x270] sm:$0xff]
    %v2073 = vld [vmem:[#allocation7 + $0x278] sm:$0xff]
    %v2074 = vld [vmem:[#allocation7 + $0x280] sm:$0xff]
    %v2075 = vld [vmem:[#allocation7 + $0x288] sm:$0xff]
    %v2076 = vld [vmem:[#allocation7 + $0x290] sm:$0xff]
    %v2077 = vld [vmem:[#allocation7 + $0x298] sm:$0xff]
    %v2078 = vld [vmem:[#allocation7 + $0x2a0] sm:$0xff]
    %v2079 = vld [vmem:[#allocation7 + $0x2a8] sm:$0xff]
    %v2080 = vld [vmem:[#allocation7 + $0x2b0] sm:$0xff]
    %v2081 = vld [vmem:[#allocation7 + $0x2b8] sm:$0xff]
    %v2082 = vld [vmem:[#allocation7 + $0x2c0] sm:$0xff]
    %v2083 = vld [vmem:[#allocation7 + $0x2c8] sm:$0xff]
    %v2084 = vld [vmem:[#allocation7 + $0x2d0] sm:$0xff]
    %v2085 = vld [vmem:[#allocation7 + $0x2d8] sm:$0xff]
    %v2086 = vld [vmem:[#allocation7 + $0x2e0] sm:$0xff]
    %v2087 = vld [vmem:[#allocation7 + $0x2e8] sm:$0xff]
    %v2088 = vld [vmem:[#allocation7 + $0x2f0] sm:$0xff]
    %v2089 = vld [vmem:[#allocation7 + $0x2f8] sm:$0xff]
    %v2090 = vld [vmem:[#allocation7 + $0x300] sm:$0xff]
    %v2091 = vld [vmem:[#allocation7 + $0x308] sm:$0xff]
    %v2092 = vld [vmem:[#allocation7 + $0x310] sm:$0xff]
    %v2093 = vld [vmem:[#allocation7 + $0x318] sm:$0xff]
    %v2094 = vld [vmem:[#allocation7 + $0x320] sm:$0xff]
    %v2095 = vld [vmem:[#allocation7 + $0x328] sm:$0xff]
    %v2096 = vld [vmem:[#allocation7 + $0x330] sm:$0xff]
    %v2097 = vld [vmem:[#allocation7 + $0x338] sm:$0xff]
    %v2098 = vld [vmem:[#allocation7 + $0x340] sm:$0xff]
    %v2099 = vld [vmem:[#allocation7 + $0x348] sm:$0xff]
    %v2100 = vld [vmem:[#allocation7 + $0x350] sm:$0xff]
    %v2101 = vld [vmem:[#allocation7 + $0x358] sm:$0xff]
    %v2102 = vld [vmem:[#allocation7 + $0x360] sm:$0xff]
    %v2103 = vld [vmem:[#allocation7 + $0x368] sm:$0xff]
    %v2104 = vld [vmem:[#allocation7 + $0x370] sm:$0xff]
    %v2105 = vld [vmem:[#allocation7 + $0x378] sm:$0xff]
    %v2106 = vld [vmem:[#allocation7 + $0x380] sm:$0xff]
    %v2107 = vld [vmem:[#allocation7 + $0x388] sm:$0xff]
    %v2108 = vld [vmem:[#allocation7 + $0x390] sm:$0xff]
    %v2109 = vld [vmem:[#allocation7 + $0x398] sm:$0xff]
    %v2110 = vld [vmem:[#allocation7 + $0x3a0] sm:$0xff]
    %v2111 = vld [vmem:[#allocation7 + $0x3a8] sm:$0xff]
    %v2112 = vld [vmem:[#allocation7 + $0x3b0] sm:$0xff]
    %v2113 = vld [vmem:[#allocation7 + $0x3b8] sm:$0xff]
    %v2114 = vld [vmem:[#allocation7 + $0x3c0] sm:$0xff]
    %v2115 = vld [vmem:[#allocation7 + $0x3c8] sm:$0xff]
    %v2116 = vld [vmem:[#allocation7 + $0x3d0] sm:$0xff]
    %v2117 = vld [vmem:[#allocation7 + $0x3d8] sm:$0xff]
    %v2118 = vld [vmem:[#allocation7 + $0x3e0] sm:$0xff]
    %v2119 = vld [vmem:[#allocation7 + $0x3e8] sm:$0xff]
    %v2120 = vld [vmem:[#allocation7 + $0x3f0] sm:$0xff]
    %v2121 = vld [vmem:[#allocation7 + $0x3f8] sm:$0xff]
    %v2122 = vld [vmem:[%s4] sm:$0xf]
    %v2124 = vlaneseq
    %v2125 = vshrl.u32 %v2124, 7
    %v2126 = vsub.s32 0, %v2125
    %v2127 = vrot.slane %v2122, %v2126
    %v2128 = vlaneseq
    %v2129 = vshrl.u32 %v2128, 7
    %v2130 = vsub.s32 1, %v2129
    %v2131 = vrot.slane %v2122, %v2130
    %v2132 = vlaneseq
    %v2133 = vshrl.u32 %v2132, 7
    %v2134 = vsub.s32 2, %v2133
    %v2135 = vrot.slane %v2122, %v2134
    %v2136 = vlaneseq
    %v2137 = vshrl.u32 %v2136, 7
    %v2138 = vsub.s32 3, %v2137
    %v2139 = vrot.slane %v2122, %v2138
    %v2272 = vunpack.c.l.b16 %v1994
    %v2273 = vunpack.c.h.b16 %v1994
    %v2274 = vunpack.c.l.b16 %v1995
    %v2275 = vunpack.c.h.b16 %v1995
    %v2276 = vunpack.c.l.b16 %v1996
    %v2277 = vunpack.c.h.b16 %v1996
    %v2278 = vunpack.c.l.b16 %v1997
    %v2279 = vunpack.c.h.b16 %v1997
    %v2280 = vunpack.c.l.b16 %v1998
    %v2281 = vunpack.c.h.b16 %v1998
    %v2282 = vunpack.c.l.b16 %v1999
    %v2283 = vunpack.c.h.b16 %v1999
    %v2284 = vunpack.c.l.b16 %v2000
    %v2285 = vunpack.c.h.b16 %v2000
    %v2286 = vunpack.c.l.b16 %v2001
    %v2287 = vunpack.c.h.b16 %v2001
    %v2288 = vunpack.c.l.b16 %v2002
    %v2289 = vunpack.c.h.b16 %v2002
    %v2290 = vunpack.c.l.b16 %v2003
    %v2291 = vunpack.c.h.b16 %v2003
    %v2292 = vunpack.c.l.b16 %v2004
    %v2293 = vunpack.c.h.b16 %v2004
    %v2294 = vunpack.c.l.b16 %v2005
    %v2295 = vunpack.c.h.b16 %v2005
    %v2296 = vunpack.c.l.b16 %v2006
    %v2297 = vunpack.c.h.b16 %v2006
    %v2298 = vunpack.c.l.b16 %v2007
    %v2299 = vunpack.c.h.b16 %v2007
    %v2300 = vunpack.c.l.b16 %v2008
    %v2301 = vunpack.c.h.b16 %v2008
    %v2302 = vunpack.c.l.b16 %v2009
    %v2303 = vunpack.c.h.b16 %v2009
    %v2304 = vunpack.c.l.b16 %v2010
    %v2305 = vunpack.c.h.b16 %v2010
    %v2306 = vunpack.c.l.b16 %v2011
    %v2307 = vunpack.c.h.b16 %v2011
    %v2308 = vunpack.c.l.b16 %v2012
    %v2309 = vunpack.c.h.b16 %v2012
    %v2310 = vunpack.c.l.b16 %v2013
    %v2311 = vunpack.c.h.b16 %v2013
    %v2312 = vunpack.c.l.b16 %v2014
    %v2313 = vunpack.c.h.b16 %v2014
    %v2314 = vunpack.c.l.b16 %v2015
    %v2315 = vunpack.c.h.b16 %v2015
    %v2316 = vunpack.c.l.b16 %v2016
    %v2317 = vunpack.c.h.b16 %v2016
    %v2318 = vunpack.c.l.b16 %v2017
    %v2319 = vunpack.c.h.b16 %v2017
    %v2320 = vunpack.c.l.b16 %v2018
    %v2321 = vunpack.c.h.b16 %v2018
    %v2322 = vunpack.c.l.b16 %v2019
    %v2323 = vunpack.c.h.b16 %v2019
    %v2324 = vunpack.c.l.b16 %v2020
    %v2325 = vunpack.c.h.b16 %v2020
    %v2326 = vunpack.c.l.b16 %v2021
    %v2327 = vunpack.c.h.b16 %v2021
    %v2328 = vunpack.c.l.b16 %v2022
    %v2329 = vunpack.c.h.b16 %v2022
    %v2330 = vunpack.c.l.b16 %v2023
    %v2331 = vunpack.c.h.b16 %v2023
    %v2332 = vunpack.c.l.b16 %v2024
    %v2333 = vunpack.c.h.b16 %v2024
    %v2334 = vunpack.c.l.b16 %v2025
    %v2335 = vunpack.c.h.b16 %v2025
    %v2336 = vunpack.c.l.b16 %v2026
    %v2337 = vunpack.c.h.b16 %v2026
    %v2338 = vunpack.c.l.b16 %v2027
    %v2339 = vunpack.c.h.b16 %v2027
    %v2340 = vunpack.c.l.b16 %v2028
    %v2341 = vunpack.c.h.b16 %v2028
    %v2342 = vunpack.c.l.b16 %v2029
    %v2343 = vunpack.c.h.b16 %v2029
    %v2344 = vunpack.c.l.b16 %v2030
    %v2345 = vunpack.c.h.b16 %v2030
    %v2346 = vunpack.c.l.b16 %v2031
    %v2347 = vunpack.c.h.b16 %v2031
    %v2348 = vunpack.c.l.b16 %v2032
    %v2349 = vunpack.c.h.b16 %v2032
    %v2350 = vunpack.c.l.b16 %v2033
    %v2351 = vunpack.c.h.b16 %v2033
    %v2352 = vunpack.c.l.b16 %v2034
    %v2353 = vunpack.c.h.b16 %v2034
    %v2354 = vunpack.c.l.b16 %v2035
    %v2355 = vunpack.c.h.b16 %v2035
    %v2356 = vunpack.c.l.b16 %v2036
    %v2357 = vunpack.c.h.b16 %v2036
    %v2358 = vunpack.c.l.b16 %v2037
    %v2359 = vunpack.c.h.b16 %v2037
    %v2360 = vunpack.c.l.b16 %v2038
    %v2361 = vunpack.c.h.b16 %v2038
    %v2362 = vunpack.c.l.b16 %v2039
    %v2363 = vunpack.c.h.b16 %v2039
    %v2364 = vunpack.c.l.b16 %v2040
    %v2365 = vunpack.c.h.b16 %v2040
    %v2366 = vunpack.c.l.b16 %v2041
    %v2367 = vunpack.c.h.b16 %v2041
    %v2368 = vunpack.c.l.b16 %v2042
    %v2369 = vunpack.c.h.b16 %v2042
    %v2370 = vunpack.c.l.b16 %v2043
    %v2371 = vunpack.c.h.b16 %v2043
    %v2372 = vunpack.c.l.b16 %v2044
    %v2373 = vunpack.c.h.b16 %v2044
    %v2374 = vunpack.c.l.b16 %v2045
    %v2375 = vunpack.c.h.b16 %v2045
    %v2376 = vunpack.c.l.b16 %v2046
    %v2377 = vunpack.c.h.b16 %v2046
    %v2378 = vunpack.c.l.b16 %v2047
    %v2379 = vunpack.c.h.b16 %v2047
    %v2380 = vunpack.c.l.b16 %v2048
    %v2381 = vunpack.c.h.b16 %v2048
    %v2382 = vunpack.c.l.b16 %v2049
    %v2383 = vunpack.c.h.b16 %v2049
    %v2384 = vunpack.c.l.b16 %v2050
    %v2385 = vunpack.c.h.b16 %v2050
    %v2386 = vunpack.c.l.b16 %v2051
    %v2387 = vunpack.c.h.b16 %v2051
    %v2388 = vunpack.c.l.b16 %v2052
    %v2389 = vunpack.c.h.b16 %v2052
    %v2390 = vunpack.c.l.b16 %v2053
    %v2391 = vunpack.c.h.b16 %v2053
    %v2392 = vunpack.c.l.b16 %v2054
    %v2393 = vunpack.c.h.b16 %v2054
    %v2394 = vunpack.c.l.b16 %v2055
    %v2395 = vunpack.c.h.b16 %v2055
    %v2396 = vunpack.c.l.b16 %v2056
    %v2397 = vunpack.c.h.b16 %v2056
    %v2398 = vunpack.c.l.b16 %v2057
    %v2399 = vunpack.c.h.b16 %v2057
    %v2400 = vunpack.c.l.b16 %v2058
    %v2401 = vunpack.c.h.b16 %v2058
    %v2402 = vunpack.c.l.b16 %v2059
    %v2403 = vunpack.c.h.b16 %v2059
    %v2404 = vunpack.c.l.b16 %v2060
    %v2405 = vunpack.c.h.b16 %v2060
    %v2406 = vunpack.c.l.b16 %v2061
    %v2407 = vunpack.c.h.b16 %v2061
    %v2408 = vunpack.c.l.b16 %v2062
    %v2409 = vunpack.c.h.b16 %v2062
    %v2410 = vunpack.c.l.b16 %v2063
    %v2411 = vunpack.c.h.b16 %v2063
    %v2412 = vunpack.c.l.b16 %v2064
    %v2413 = vunpack.c.h.b16 %v2064
    %v2414 = vunpack.c.l.b16 %v2065
    %v2415 = vunpack.c.h.b16 %v2065
    %v2416 = vunpack.c.l.b16 %v2066
    %v2417 = vunpack.c.h.b16 %v2066
    %v2418 = vunpack.c.l.b16 %v2067
    %v2419 = vunpack.c.h.b16 %v2067
    %v2420 = vunpack.c.l.b16 %v2068
    %v2421 = vunpack.c.h.b16 %v2068
    %v2422 = vunpack.c.l.b16 %v2069
    %v2423 = vunpack.c.h.b16 %v2069
    %v2424 = vunpack.c.l.b16 %v2070
    %v2425 = vunpack.c.h.b16 %v2070
    %v2426 = vunpack.c.l.b16 %v2071
    %v2427 = vunpack.c.h.b16 %v2071
    %v2428 = vunpack.c.l.b16 %v2072
    %v2429 = vunpack.c.h.b16 %v2072
    %v2430 = vunpack.c.l.b16 %v2073
    %v2431 = vunpack.c.h.b16 %v2073
    %v2432 = vunpack.c.l.b16 %v2074
    %v2433 = vunpack.c.h.b16 %v2074
    %v2434 = vunpack.c.l.b16 %v2075
    %v2435 = vunpack.c.h.b16 %v2075
    %v2436 = vunpack.c.l.b16 %v2076
    %v2437 = vunpack.c.h.b16 %v2076
    %v2438 = vunpack.c.l.b16 %v2077
    %v2439 = vunpack.c.h.b16 %v2077
    %v2440 = vunpack.c.l.b16 %v2078
    %v2441 = vunpack.c.h.b16 %v2078
    %v2442 = vunpack.c.l.b16 %v2079
    %v2443 = vunpack.c.h.b16 %v2079
    %v2444 = vunpack.c.l.b16 %v2080
    %v2445 = vunpack.c.h.b16 %v2080
    %v2446 = vunpack.c.l.b16 %v2081
    %v2447 = vunpack.c.h.b16 %v2081
    %v2448 = vunpack.c.l.b16 %v2082
    %v2449 = vunpack.c.h.b16 %v2082
    %v2450 = vunpack.c.l.b16 %v2083
    %v2451 = vunpack.c.h.b16 %v2083
    %v2452 = vunpack.c.l.b16 %v2084
    %v2453 = vunpack.c.h.b16 %v2084
    %v2454 = vunpack.c.l.b16 %v2085
    %v2455 = vunpack.c.h.b16 %v2085
    %v2456 = vunpack.c.l.b16 %v2086
    %v2457 = vunpack.c.h.b16 %v2086
    %v2458 = vunpack.c.l.b16 %v2087
    %v2459 = vunpack.c.h.b16 %v2087
    %v2460 = vunpack.c.l.b16 %v2088
    %v2461 = vunpack.c.h.b16 %v2088
    %v2462 = vunpack.c.l.b16 %v2089
    %v2463 = vunpack.c.h.b16 %v2089
    %v2464 = vunpack.c.l.b16 %v2090
    %v2465 = vunpack.c.h.b16 %v2090
    %v2466 = vunpack.c.l.b16 %v2091
    %v2467 = vunpack.c.h.b16 %v2091
    %v2468 = vunpack.c.l.b16 %v2092
    %v2469 = vunpack.c.h.b16 %v2092
    %v2470 = vunpack.c.l.b16 %v2093
    %v2471 = vunpack.c.h.b16 %v2093
    %v2472 = vunpack.c.l.b16 %v2094
    %v2473 = vunpack.c.h.b16 %v2094
    %v2474 = vunpack.c.l.b16 %v2095
    %v2475 = vunpack.c.h.b16 %v2095
    %v2476 = vunpack.c.l.b16 %v2096
    %v2477 = vunpack.c.h.b16 %v2096
    %v2478 = vunpack.c.l.b16 %v2097
    %v2479 = vunpack.c.h.b16 %v2097
    %v2480 = vunpack.c.l.b16 %v2098
    %v2481 = vunpack.c.h.b16 %v2098
    %v2482 = vunpack.c.l.b16 %v2099
    %v2483 = vunpack.c.h.b16 %v2099
    %v2484 = vunpack.c.l.b16 %v2100
    %v2485 = vunpack.c.h.b16 %v2100
    %v2486 = vunpack.c.l.b16 %v2101
    %v2487 = vunpack.c.h.b16 %v2101
    %v2488 = vunpack.c.l.b16 %v2102
    %v2489 = vunpack.c.h.b16 %v2102
    %v2490 = vunpack.c.l.b16 %v2103
    %v2491 = vunpack.c.h.b16 %v2103
    %v2492 = vunpack.c.l.b16 %v2104
    %v2493 = vunpack.c.h.b16 %v2104
    %v2494 = vunpack.c.l.b16 %v2105
    %v2495 = vunpack.c.h.b16 %v2105
    %v2496 = vunpack.c.l.b16 %v2106
    %v2497 = vunpack.c.h.b16 %v2106
    %v2498 = vunpack.c.l.b16 %v2107
    %v2499 = vunpack.c.h.b16 %v2107
    %v2500 = vunpack.c.l.b16 %v2108
    %v2501 = vunpack.c.h.b16 %v2108
    %v2502 = vunpack.c.l.b16 %v2109
    %v2503 = vunpack.c.h.b16 %v2109
    %v2504 = vunpack.c.l.b16 %v2110
    %v2505 = vunpack.c.h.b16 %v2110
    %v2506 = vunpack.c.l.b16 %v2111
    %v2507 = vunpack.c.h.b16 %v2111
    %v2508 = vunpack.c.l.b16 %v2112
    %v2509 = vunpack.c.h.b16 %v2112
    %v2510 = vunpack.c.l.b16 %v2113
    %v2511 = vunpack.c.h.b16 %v2113
    %v2512 = vunpack.c.l.b16 %v2114
    %v2513 = vunpack.c.h.b16 %v2114
    %v2514 = vunpack.c.l.b16 %v2115
    %v2515 = vunpack.c.h.b16 %v2115
    %v2516 = vunpack.c.l.b16 %v2116
    %v2517 = vunpack.c.h.b16 %v2116
    %v2518 = vunpack.c.l.b16 %v2117
    %v2519 = vunpack.c.h.b16 %v2117
    %v2520 = vunpack.c.l.b16 %v2118
    %v2521 = vunpack.c.h.b16 %v2118
    %v2522 = vunpack.c.l.b16 %v2119
    %v2523 = vunpack.c.h.b16 %v2119
    %v2524 = vunpack.c.l.b16 %v2120
    %v2525 = vunpack.c.h.b16 %v2120
    %v2526 = vunpack.c.l.b16 %v2121
    %v2527 = vunpack.c.h.b16 %v2121
    %v2528 = vpack.c.b16 %v2276, %v2272
    %v2529 = vpack.c.b16 %v2277, %v2273
    %v2530 = vpack.c.b16 %v2278, %v2274
    %v2531 = vpack.c.b16 %v2279, %v2275
    %v2532 = vpack.c.b16 %v2284, %v2280
    %v2533 = vpack.c.b16 %v2285, %v2281
    %v2534 = vpack.c.b16 %v2286, %v2282
    %v2535 = vpack.c.b16 %v2287, %v2283
    %v2536 = vpack.c.b16 %v2292, %v2288
    %v2537 = vpack.c.b16 %v2293, %v2289
    %v2538 = vpack.c.b16 %v2294, %v2290
    %v2539 = vpack.c.b16 %v2295, %v2291
    %v2540 = vpack.c.b16 %v2300, %v2296
    %v2541 = vpack.c.b16 %v2301, %v2297
    %v2542 = vpack.c.b16 %v2302, %v2298
    %v2543 = vpack.c.b16 %v2303, %v2299
    %v2544 = vpack.c.b16 %v2308, %v2304
    %v2545 = vpack.c.b16 %v2309, %v2305
    %v2546 = vpack.c.b16 %v2310, %v2306
    %v2547 = vpack.c.b16 %v2311, %v2307
    %v2548 = vpack.c.b16 %v2316, %v2312
    %v2549 = vpack.c.b16 %v2317, %v2313
    %v2550 = vpack.c.b16 %v2318, %v2314
    %v2551 = vpack.c.b16 %v2319, %v2315
    %v2552 = vpack.c.b16 %v2324, %v2320
    %v2553 = vpack.c.b16 %v2325, %v2321
    %v2554 = vpack.c.b16 %v2326, %v2322
    %v2555 = vpack.c.b16 %v2327, %v2323
    %v2556 = vpack.c.b16 %v2332, %v2328
    %v2557 = vpack.c.b16 %v2333, %v2329
    %v2558 = vpack.c.b16 %v2334, %v2330
    %v2559 = vpack.c.b16 %v2335, %v2331
    %v2560 = vpack.c.b16 %v2340, %v2336
    %v2561 = vpack.c.b16 %v2341, %v2337
    %v2562 = vpack.c.b16 %v2342, %v2338
    %v2563 = vpack.c.b16 %v2343, %v2339
    %v2564 = vpack.c.b16 %v2348, %v2344
    %v2565 = vpack.c.b16 %v2349, %v2345
    %v2566 = vpack.c.b16 %v2350, %v2346
    %v2567 = vpack.c.b16 %v2351, %v2347
    %v2568 = vpack.c.b16 %v2356, %v2352
    %v2569 = vpack.c.b16 %v2357, %v2353
    %v2570 = vpack.c.b16 %v2358, %v2354
    %v2571 = vpack.c.b16 %v2359, %v2355
    %v2572 = vpack.c.b16 %v2364, %v2360
    %v2573 = vpack.c.b16 %v2365, %v2361
    %v2574 = vpack.c.b16 %v2366, %v2362
    %v2575 = vpack.c.b16 %v2367, %v2363
    %v2576 = vpack.c.b16 %v2372, %v2368
    %v2577 = vpack.c.b16 %v2373, %v2369
    %v2578 = vpack.c.b16 %v2374, %v2370
    %v2579 = vpack.c.b16 %v2375, %v2371
    %v2580 = vpack.c.b16 %v2380, %v2376
    %v2581 = vpack.c.b16 %v2381, %v2377
    %v2582 = vpack.c.b16 %v2382, %v2378
    %v2583 = vpack.c.b16 %v2383, %v2379
    %v2584 = vpack.c.b16 %v2388, %v2384
    %v2585 = vpack.c.b16 %v2389, %v2385
    %v2586 = vpack.c.b16 %v2390, %v2386
    %v2587 = vpack.c.b16 %v2391, %v2387
    %v2588 = vpack.c.b16 %v2396, %v2392
    %v2589 = vpack.c.b16 %v2397, %v2393
    %v2590 = vpack.c.b16 %v2398, %v2394
    %v2591 = vpack.c.b16 %v2399, %v2395
    %v2592 = vpack.c.b16 %v2404, %v2400
    %v2593 = vpack.c.b16 %v2405, %v2401
    %v2594 = vpack.c.b16 %v2406, %v2402
    %v2595 = vpack.c.b16 %v2407, %v2403
    %v2596 = vpack.c.b16 %v2412, %v2408
    %v2597 = vpack.c.b16 %v2413, %v2409
    %v2598 = vpack.c.b16 %v2414, %v2410
    %v2599 = vpack.c.b16 %v2415, %v2411
    %v2600 = vpack.c.b16 %v2420, %v2416
    %v2601 = vpack.c.b16 %v2421, %v2417
    %v2602 = vpack.c.b16 %v2422, %v2418
    %v2603 = vpack.c.b16 %v2423, %v2419
    %v2604 = vpack.c.b16 %v2428, %v2424
    %v2605 = vpack.c.b16 %v2429, %v2425
    %v2606 = vpack.c.b16 %v2430, %v2426
    %v2607 = vpack.c.b16 %v2431, %v2427
    %v2608 = vpack.c.b16 %v2436, %v2432
    %v2609 = vpack.c.b16 %v2437, %v2433
    %v2610 = vpack.c.b16 %v2438, %v2434
    %v2611 = vpack.c.b16 %v2439, %v2435
    %v2612 = vpack.c.b16 %v2444, %v2440
    %v2613 = vpack.c.b16 %v2445, %v2441
    %v2614 = vpack.c.b16 %v2446, %v2442
    %v2615 = vpack.c.b16 %v2447, %v2443
    %v2616 = vpack.c.b16 %v2452, %v2448
    %v2617 = vpack.c.b16 %v2453, %v2449
    %v2618 = vpack.c.b16 %v2454, %v2450
    %v2619 = vpack.c.b16 %v2455, %v2451
    %v2620 = vpack.c.b16 %v2460, %v2456
    %v2621 = vpack.c.b16 %v2461, %v2457
    %v2622 = vpack.c.b16 %v2462, %v2458
    %v2623 = vpack.c.b16 %v2463, %v2459
    %v2624 = vpack.c.b16 %v2468, %v2464
    %v2625 = vpack.c.b16 %v2469, %v2465
    %v2626 = vpack.c.b16 %v2470, %v2466
    %v2627 = vpack.c.b16 %v2471, %v2467
    %v2628 = vpack.c.b16 %v2476, %v2472
    %v2629 = vpack.c.b16 %v2477, %v2473
    %v2630 = vpack.c.b16 %v2478, %v2474
    %v2631 = vpack.c.b16 %v2479, %v2475
    %v2632 = vpack.c.b16 %v2484, %v2480
    %v2633 = vpack.c.b16 %v2485, %v2481
    %v2634 = vpack.c.b16 %v2486, %v2482
    %v2635 = vpack.c.b16 %v2487, %v2483
    %v2636 = vpack.c.b16 %v2492, %v2488
    %v2637 = vpack.c.b16 %v2493, %v2489
    %v2638 = vpack.c.b16 %v2494, %v2490
    %v2639 = vpack.c.b16 %v2495, %v2491
    %v2640 = vpack.c.b16 %v2500, %v2496
    %v2641 = vpack.c.b16 %v2501, %v2497
    %v2642 = vpack.c.b16 %v2502, %v2498
    %v2643 = vpack.c.b16 %v2503, %v2499
    %v2644 = vpack.c.b16 %v2508, %v2504
    %v2645 = vpack.c.b16 %v2509, %v2505
    %v2646 = vpack.c.b16 %v2510, %v2506
    %v2647 = vpack.c.b16 %v2511, %v2507
    %v2648 = vpack.c.b16 %v2516, %v2512
    %v2649 = vpack.c.b16 %v2517, %v2513
    %v2650 = vpack.c.b16 %v2518, %v2514
    %v2651 = vpack.c.b16 %v2519, %v2515
    %v2652 = vpack.c.b16 %v2524, %v2520
    %v2653 = vpack.c.b16 %v2525, %v2521
    %v2654 = vpack.c.b16 %v2526, %v2522
    %v2655 = vpack.c.b16 %v2527, %v2523
    %2784 = vmatprep.subr.bf16.mxu0 %v2529
    %2785 = vmatpush1.bf16.msra.mxu0 %v2528
    %2786 = vmatprep.subr.bf16.mxu0 %v2533
    %2787 = vmatpush1.bf16.msra.mxu0 %v2532
    %2788 = vmatprep.subr.bf16.mxu0 %v2537
    %2789 = vmatpush1.bf16.msra.mxu0 %v2536
    %2790 = vmatprep.subr.bf16.mxu0 %v2541
    %2791 = vmatpush1.bf16.msra.mxu0 %v2540
    %2792 = vmatprep.subr.bf16.mxu0 %v2545
    %2793 = vmatpush1.bf16.msra.mxu0 %v2544
    %2794 = vmatprep.subr.bf16.mxu0 %v2549
    %2795 = vmatpush1.bf16.msra.mxu0 %v2548
    %2796 = vmatprep.subr.bf16.mxu0 %v2553
    %2797 = vmatpush1.bf16.msra.mxu0 %v2552
    %2798 = vmatprep.subr.bf16.mxu0 %v2557
    %2799 = vmatpush1.bf16.msra.mxu0 %v2556
    %2800 = vmatprep.subr.bf16.mxu0 %v2561
    %2801 = vmatpush1.bf16.msra.mxu0 %v2560
    %2802 = vmatprep.subr.bf16.mxu0 %v2565
    %2803 = vmatpush1.bf16.msra.mxu0 %v2564
    %2804 = vmatprep.subr.bf16.mxu0 %v2569
    %2805 = vmatpush1.bf16.msra.mxu0 %v2568
    %2806 = vmatprep.subr.bf16.mxu0 %v2573
    %2807 = vmatpush1.bf16.msra.mxu0 %v2572
    %2808 = vmatprep.subr.bf16.mxu0 %v2577
    %2809 = vmatpush1.bf16.msra.mxu0 %v2576
    %2810 = vmatprep.subr.bf16.mxu0 %v2581
    %2811 = vmatpush1.bf16.msra.mxu0 %v2580
    %2812 = vmatprep.subr.bf16.mxu0 %v2585
    %2813 = vmatpush1.bf16.msra.mxu0 %v2584
    %2814 = vmatprep.subr.bf16.mxu0 %v2589
    %2815 = vmatpush1.bf16.msra.mxu0 %v2588
    %2816 = vmatprep.mubr.bf16.mxu0 %v1991
    %2817 = vmatmul.mubr.bf16.gmra.mrb[0].mxu0 %v1990
    %v2818 = vpop.f32.mrb[0].mxu0
    %v2819 = vadd.f32 %v2127, %v2818
    %v2820 = vpop.f32.mrb[0].mxu0
    %v2821 = vadd.f32 %v2131, %v2820
    %v2822 = vpop.f32.mrb[0].mxu0
    %v2823 = vpop.f32.mrb[0].mxu0
    %2824 = vdwg.mxu0
    %2825 = vmatprep.subr.bf16.mxu0 %v2593
    %2826 = vmatpush1.bf16.msra.mxu0 %v2592
    %2827 = vmatprep.subr.bf16.mxu0 %v2597
    %2828 = vmatpush1.bf16.msra.mxu0 %v2596
    %2829 = vmatprep.subr.bf16.mxu0 %v2601
    %2830 = vmatpush1.bf16.msra.mxu0 %v2600
    %2831 = vmatprep.subr.bf16.mxu0 %v2605
    %2832 = vmatpush1.bf16.msra.mxu0 %v2604
    %2833 = vmatprep.subr.bf16.mxu0 %v2609
    %2834 = vmatpush1.bf16.msra.mxu0 %v2608
    %2835 = vmatprep.subr.bf16.mxu0 %v2613
    %2836 = vmatpush1.bf16.msra.mxu0 %v2612
    %2837 = vmatprep.subr.bf16.mxu0 %v2617
    %2838 = vmatpush1.bf16.msra.mxu0 %v2616
    %2839 = vmatprep.subr.bf16.mxu0 %v2621
    %2840 = vmatpush1.bf16.msra.mxu0 %v2620
    %2841 = vmatprep.subr.bf16.mxu0 %v2625
    %2842 = vmatpush1.bf16.msra.mxu0 %v2624
    %2843 = vmatprep.subr.bf16.mxu0 %v2629
    %2844 = vmatpush1.bf16.msra.mxu0 %v2628
    %2845 = vmatprep.subr.bf16.mxu0 %v2633
    %2846 = vmatpush1.bf16.msra.mxu0 %v2632
    %2847 = vmatprep.subr.bf16.mxu0 %v2637
    %2848 = vmatpush1.bf16.msra.mxu0 %v2636
    %2849 = vmatprep.subr.bf16.mxu0 %v2641
    %2850 = vmatpush1.bf16.msra.mxu0 %v2640
    %2851 = vmatprep.subr.bf16.mxu0 %v2645
    %2852 = vmatpush1.bf16.msra.mxu0 %v2644
    %2853 = vmatprep.subr.bf16.mxu0 %v2649
    %2854 = vmatpush1.bf16.msra.mxu0 %v2648
    %2855 = vmatprep.subr.bf16.mxu0 %v2653
    %2856 = vmatpush1.bf16.msra.mxu0 %v2652
    %2857 = vmatprep.mubr.bf16.mxu0 %v1993
    %2858 = vmatmul.mubr.bf16.gmra.mrb[0].mxu0 %v1992
    %v2859 = vpop.f32.mrb[0].mxu0
    %v2860 = vadd.f32 %v2819, %v2859
    %v2861 = vpop.f32.mrb[0].mxu0
    %v2862 = vadd.f32 %v2821, %v2861
    %v2863 = vpop.f32.mrb[0].mxu0
    %v2864 = vpop.f32.mrb[0].mxu0
    %2865 = vdwg.mxu0
    %2866 = vmatprep.subr.bf16.mxu0 %v2531
    %2867 = vmatpush1.bf16.msra.mxu0 %v2530
    %2868 = vmatprep.subr.bf16.mxu0 %v2535
    %2869 = vmatpush1.bf16.msra.mxu0 %v2534
    %2870 = vmatprep.subr.bf16.mxu0 %v2539
    %2871 = vmatpush1.bf16.msra.mxu0 %v2538
    %2872 = vmatprep.subr.bf16.mxu0 %v2543
    %2873 = vmatpush1.bf16.msra.mxu0 %v2542
    %2874 = vmatprep.subr.bf16.mxu0 %v2547
    %2875 = vmatpush1.bf16.msra.mxu0 %v2546
    %2876 = vmatprep.subr.bf16.mxu0 %v2551
    %2877 = vmatpush1.bf16.msra.mxu0 %v2550
    %2878 = vmatprep.subr.bf16.mxu0 %v2555
    %2879 = vmatpush1.bf16.msra.mxu0 %v2554
    %2880 = vmatprep.subr.bf16.mxu0 %v2559
    %2881 = vmatpush1.bf16.msra.mxu0 %v2558
    %2882 = vmatprep.subr.bf16.mxu0 %v2563
    %2883 = vmatpush1.bf16.msra.mxu0 %v2562
    %2884 = vmatprep.subr.bf16.mxu0 %v2567
    %2885 = vmatpush1.bf16.msra.mxu0 %v2566
    %2886 = vmatprep.subr.bf16.mxu0 %v2571
    %2887 = vmatpush1.bf16.msra.mxu0 %v2570
    %2888 = vmatprep.subr.bf16.mxu0 %v2575
    %2889 = vmatpush1.bf16.msra.mxu0 %v2574
    %2890 = vmatprep.subr.bf16.mxu0 %v2579
    %2891 = vmatpush1.bf16.msra.mxu0 %v2578
    %2892 = vmatprep.subr.bf16.mxu0 %v2583
    %2893 = vmatpush1.bf16.msra.mxu0 %v2582
    %2894 = vmatprep.subr.bf16.mxu0 %v2587
    %2895 = vmatpush1.bf16.msra.mxu0 %v2586
    %2896 = vmatprep.subr.bf16.mxu0 %v2591
    %2897 = vmatpush1.bf16.msra.mxu0 %v2590
    %2898 = vmatprep.mubr.bf16.mxu0 %v1991
    %2899 = vmatmul.mubr.bf16.gmra.mrb[0].mxu0 %v1990
    %v2900 = vpop.f32.mrb[0].mxu0
    %v2901 = vadd.f32 %v2135, %v2900
    %v2902 = vpop.f32.mrb[0].mxu0
    %v2903 = vadd.f32 %v2139, %v2902
    %v2904 = vpop.f32.mrb[0].mxu0
    %v2905 = vpop.f32.mrb[0].mxu0
    %2906 = vdwg.mxu0
    %2907 = vmatprep.subr.bf16.mxu0 %v2595
    %2908 = vmatpush1.bf16.msra.mxu0 %v2594
    %2909 = vmatprep.subr.bf16.mxu0 %v2599
    %2910 = vmatpush1.bf16.msra.mxu0 %v2598
    %2911 = vmatprep.subr.bf16.mxu0 %v2603
    %2912 = vmatpush1.bf16.msra.mxu0 %v2602
    %2913 = vmatprep.subr.bf16.mxu0 %v2607
    %2914 = vmatpush1.bf16.msra.mxu0 %v2606
    %2915 = vmatprep.subr.bf16.mxu0 %v2611
    %2916 = vmatpush1.bf16.msra.mxu0 %v2610
    %2917 = vmatprep.subr.bf16.mxu0 %v2615
    %2918 = vmatpush1.bf16.msra.mxu0 %v2614
    %2919 = vmatprep.subr.bf16.mxu0 %v2619
    %2920 = vmatpush1.bf16.msra.mxu0 %v2618
    %2921 = vmatprep.subr.bf16.mxu0 %v2623
    %2922 = vmatpush1.bf16.msra.mxu0 %v2622
    %2923 = vmatprep.subr.bf16.mxu0 %v2627
    %2924 = vmatpush1.bf16.msra.mxu0 %v2626
    %2925 = vmatprep.subr.bf16.mxu0 %v2631
    %2926 = vmatpush1.bf16.msra.mxu0 %v2630
    %2927 = vmatprep.subr.bf16.mxu0 %v2635
    %2928 = vmatpush1.bf16.msra.mxu0 %v2634
    %2929 = vmatprep.subr.bf16.mxu0 %v2639
    %2930 = vmatpush1.bf16.msra.mxu0 %v2638
    %2931 = vmatprep.subr.bf16.mxu0 %v2643
    %2932 = vmatpush1.bf16.msra.mxu0 %v2642
    %2933 = vmatprep.subr.bf16.mxu0 %v2647
    %2934 = vmatpush1.bf16.msra.mxu0 %v2646
    %2935 = vmatprep.subr.bf16.mxu0 %v2651
    %2936 = vmatpush1.bf16.msra.mxu0 %v2650
    %2937 = vmatprep.subr.bf16.mxu0 %v2655
    %2938 = vmatpush1.bf16.msra.mxu0 %v2654
    %2939 = vmatprep.mubr.bf16.mxu0 %v1993
    %2940 = vmatmul.mubr.bf16.gmra.mrb[0].mxu0 %v1992
    %v2941 = vpop.f32.mrb[0].mxu0
    %v2942 = vadd.f32 %v2901, %v2941
    %v2943 = vpop.f32.mrb[0].mxu0
    %v2944 = vadd.f32 %v2903, %v2943
    %v2945 = vpop.f32.mrb[0].mxu0
    %v2946 = vpop.f32.mrb[0].mxu0
    %2947 = vdwg.mxu0
    %v2948 = vmax.f32 %v2860, 0.0
    %v2949 = vmax.f32 %v2862, 0.0
    %v2950 = vmax.f32 %v2942, 0.0
    %v2951 = vmax.f32 %v2944, 0.0
    %v2952 = vpack.c.bf16 %v2948, %v2948
    %v2953 = vpack.c.bf16 %v2949, %v2949
    %v2954 = vpack.c.bf16 %v2950, %v2950
    %v2955 = vpack.c.bf16 %v2951, %v2951
    %v2960 = vunpack.c.l.b16 %v2952
    %v2961 = vunpack.c.l.b16 %v2953
    %v2962 = vunpack.c.l.b16 %v2954
    %v2963 = vunpack.c.l.b16 %v2955
    %v2964 = vpack.c.b16 %v2961, %v2960
    %v2965 = vpack.c.b16 %v2963, %v2962
    %2968 = vst [vmem:[#allocation10] sm:$0xff] %v2964
    %vm2969 = vcmask 1043456
    %vm2970 = vcmask 130052
    %vm2971 = vmor %vm2970, %vm2969
    %2972 = vst.msk [vmem:[#allocation10 + $0x8] sm:$0xff] %vm2971, %v2965
    %v2973 = vld [vmem:[#allocation8] sm:$0xff]
    %v2974 = vld [vmem:[#allocation8 + $0x8] sm:$0xff]
    %v2975 = vld [vmem:[#allocation8 + $0x10] sm:$0xff]
    %v2976 = vld [vmem:[#allocation8 + $0x18] sm:$0xff]
    %v2977 = vld [vmem:[#allocation8 + $0x20] sm:$0xff]
    %v2978 = vld [vmem:[#allocation8 + $0x28] sm:$0xff]
    %v2979 = vld [vmem:[#allocation8 + $0x30] sm:$0xff]
    %v2980 = vld [vmem:[#allocation8 + $0x38] sm:$0xff]
    %v2981 = vld [vmem:[#allocation8 + $0x40] sm:$0xff]
    %v2982 = vld [vmem:[#allocation8 + $0x48] sm:$0xff]
    %v2983 = vld [vmem:[#allocation8 + $0x50] sm:$0xff]
    %v2984 = vld [vmem:[#allocation8 + $0x58] sm:$0xff]
    %v2985 = vld [vmem:[#allocation8 + $0x60] sm:$0xff]
    %v2986 = vld [vmem:[#allocation8 + $0x68] sm:$0xff]
    %v2987 = vld [vmem:[#allocation8 + $0x70] sm:$0xff]
    %v2988 = vld [vmem:[#allocation8 + $0x78] sm:$0xff]
    %v2989 = vld [vmem:[#allocation8 + $0x80] sm:$0xff]
    %v2990 = vld [vmem:[#allocation8 + $0x88] sm:$0xff]
    %v2991 = vld [vmem:[#allocation8 + $0x90] sm:$0xff]
    %v2992 = vld [vmem:[#allocation8 + $0x98] sm:$0xff]
    %v2993 = vld [vmem:[#allocation8 + $0xa0] sm:$0xff]
    %v2994 = vld [vmem:[#allocation8 + $0xa8] sm:$0xff]
    %v2995 = vld [vmem:[#allocation8 + $0xb0] sm:$0xff]
    %v2996 = vld [vmem:[#allocation8 + $0xb8] sm:$0xff]
    %v2997 = vld [vmem:[#allocation8 + $0xc0] sm:$0xff]
    %v2998 = vld [vmem:[#allocation8 + $0xc8] sm:$0xff]
    %v2999 = vld [vmem:[#allocation8 + $0xd0] sm:$0xff]
    %v3000 = vld [vmem:[#allocation8 + $0xd8] sm:$0xff]
    %v3001 = vld [vmem:[#allocation8 + $0xe0] sm:$0xff]
    %v3002 = vld [vmem:[#allocation8 + $0xe8] sm:$0xff]
    %v3003 = vld [vmem:[#allocation8 + $0xf0] sm:$0xff]
    %v3004 = vld [vmem:[#allocation8 + $0xf8] sm:$0xff]
    %v3005 = vld [vmem:[#allocation8 + $0x100] sm:$0xff]
    %v3006 = vld [vmem:[#allocation8 + $0x108] sm:$0xff]
    %v3007 = vld [vmem:[#allocation8 + $0x110] sm:$0xff]
    %v3008 = vld [vmem:[#allocation8 + $0x118] sm:$0xff]
    %v3009 = vld [vmem:[#allocation8 + $0x120] sm:$0xff]
    %v3010 = vld [vmem:[#allocation8 + $0x128] sm:$0xff]
    %v3011 = vld [vmem:[#allocation8 + $0x130] sm:$0xff]
    %v3012 = vld [vmem:[#allocation8 + $0x138] sm:$0xff]
    %v3013 = vld [vmem:[#allocation8 + $0x140] sm:$0xff]
    %v3014 = vld [vmem:[#allocation8 + $0x148] sm:$0xff]
    %v3015 = vld [vmem:[#allocation8 + $0x150] sm:$0xff]
    %v3016 = vld [vmem:[#allocation8 + $0x158] sm:$0xff]
    %v3017 = vld [vmem:[#allocation8 + $0x160] sm:$0xff]
    %v3018 = vld [vmem:[#allocation8 + $0x168] sm:$0xff]
    %v3019 = vld [vmem:[#allocation8 + $0x170] sm:$0xff]
    %v3020 = vld [vmem:[#allocation8 + $0x178] sm:$0xff]
    %v3021 = vld [vmem:[#allocation8 + $0x180] sm:$0xff]
    %v3022 = vld [vmem:[#allocation8 + $0x188] sm:$0xff]
    %v3023 = vld [vmem:[#allocation8 + $0x190] sm:$0xff]
    %v3024 = vld [vmem:[#allocation8 + $0x198] sm:$0xff]
    %v3025 = vld [vmem:[#allocation8 + $0x1a0] sm:$0xff]
    %v3026 = vld [vmem:[#allocation8 + $0x1a8] sm:$0xff]
    %v3027 = vld [vmem:[#allocation8 + $0x1b0] sm:$0xff]
    %v3028 = vld [vmem:[#allocation8 + $0x1b8] sm:$0xff]
    %v3029 = vld [vmem:[#allocation8 + $0x1c0] sm:$0xff]
    %v3030 = vld [vmem:[#allocation8 + $0x1c8] sm:$0xff]
    %v3031 = vld [vmem:[#allocation8 + $0x1d0] sm:$0xff]
    %v3032 = vld [vmem:[#allocation8 + $0x1d8] sm:$0xff]
    %v3033 = vld [vmem:[#allocation8 + $0x1e0] sm:$0xff]
    %v3034 = vld [vmem:[#allocation8 + $0x1e8] sm:$0xff]
    %v3035 = vld [vmem:[#allocation8 + $0x1f0] sm:$0xff]
    %v3036 = vld [vmem:[#allocation8 + $0x1f8] sm:$0xff]
    %v3037 = vld [vmem:[%s6] sm:$0x3]
    %v3039 = vlaneseq
    %v3040 = vshrl.u32 %v3039, 7
    %v3041 = vsub.s32 0, %v3040
    %v3042 = vrot.slane %v3037, %v3041
    %v3043 = vlaneseq
    %v3044 = vshrl.u32 %v3043, 7
    %v3045 = vsub.s32 1, %v3044
    %v3046 = vrot.slane %v3037, %v3045
    %v3113 = vunpack.c.l.b16 %v2973
    %v3114 = vunpack.c.h.b16 %v2973
    %v3115 = vunpack.c.l.b16 %v2974
    %v3116 = vunpack.c.h.b16 %v2974
    %v3117 = vunpack.c.l.b16 %v2975
    %v3118 = vunpack.c.h.b16 %v2975
    %v3119 = vunpack.c.l.b16 %v2976
    %v3120 = vunpack.c.h.b16 %v2976
    %v3121 = vunpack.c.l.b16 %v2977
    %v3122 = vunpack.c.h.b16 %v2977
    %v3123 = vunpack.c.l.b16 %v2978
    %v3124 = vunpack.c.h.b16 %v2978
    %v3125 = vunpack.c.l.b16 %v2979
    %v3126 = vunpack.c.h.b16 %v2979
    %v3127 = vunpack.c.l.b16 %v2980
    %v3128 = vunpack.c.h.b16 %v2980
    %v3129 = vunpack.c.l.b16 %v2981
    %v3130 = vunpack.c.h.b16 %v2981
    %v3131 = vunpack.c.l.b16 %v2982
    %v3132 = vunpack.c.h.b16 %v2982
    %v3133 = vunpack.c.l.b16 %v2983
    %v3134 = vunpack.c.h.b16 %v2983
    %v3135 = vunpack.c.l.b16 %v2984
    %v3136 = vunpack.c.h.b16 %v2984
    %v3137 = vunpack.c.l.b16 %v2985
    %v3138 = vunpack.c.h.b16 %v2985
    %v3139 = vunpack.c.l.b16 %v2986
    %v3140 = vunpack.c.h.b16 %v2986
    %v3141 = vunpack.c.l.b16 %v2987
    %v3142 = vunpack.c.h.b16 %v2987
    %v3143 = vunpack.c.l.b16 %v2988
    %v3144 = vunpack.c.h.b16 %v2988
    %v3145 = vunpack.c.l.b16 %v2989
    %v3146 = vunpack.c.h.b16 %v2989
    %v3147 = vunpack.c.l.b16 %v2990
    %v3148 = vunpack.c.h.b16 %v2990
    %v3149 = vunpack.c.l.b16 %v2991
    %v3150 = vunpack.c.h.b16 %v2991
    %v3151 = vunpack.c.l.b16 %v2992
    %v3152 = vunpack.c.h.b16 %v2992
    %v3153 = vunpack.c.l.b16 %v2993
    %v3154 = vunpack.c.h.b16 %v2993
    %v3155 = vunpack.c.l.b16 %v2994
    %v3156 = vunpack.c.h.b16 %v2994
    %v3157 = vunpack.c.l.b16 %v2995
    %v3158 = vunpack.c.h.b16 %v2995
    %v3159 = vunpack.c.l.b16 %v2996
    %v3160 = vunpack.c.h.b16 %v2996
    %v3161 = vunpack.c.l.b16 %v2997
    %v3162 = vunpack.c.h.b16 %v2997
    %v3163 = vunpack.c.l.b16 %v2998
    %v3164 = vunpack.c.h.b16 %v2998
    %v3165 = vunpack.c.l.b16 %v2999
    %v3166 = vunpack.c.h.b16 %v2999
    %v3167 = vunpack.c.l.b16 %v3000
    %v3168 = vunpack.c.h.b16 %v3000
    %v3169 = vunpack.c.l.b16 %v3001
    %v3170 = vunpack.c.h.b16 %v3001
    %v3171 = vunpack.c.l.b16 %v3002
    %v3172 = vunpack.c.h.b16 %v3002
    %v3173 = vunpack.c.l.b16 %v3003
    %v3174 = vunpack.c.h.b16 %v3003
    %v3175 = vunpack.c.l.b16 %v3004
    %v3176 = vunpack.c.h.b16 %v3004
    %v3177 = vunpack.c.l.b16 %v3005
    %v3178 = vunpack.c.h.b16 %v3005
    %v3179 = vunpack.c.l.b16 %v3006
    %v3180 = vunpack.c.h.b16 %v3006
    %v3181 = vunpack.c.l.b16 %v3007
    %v3182 = vunpack.c.h.b16 %v3007
    %v3183 = vunpack.c.l.b16 %v3008
    %v3184 = vunpack.c.h.b16 %v3008
    %v3185 = vunpack.c.l.b16 %v3009
    %v3186 = vunpack.c.h.b16 %v3009
    %v3187 = vunpack.c.l.b16 %v3010
    %v3188 = vunpack.c.h.b16 %v3010
    %v3189 = vunpack.c.l.b16 %v3011
    %v3190 = vunpack.c.h.b16 %v3011
    %v3191 = vunpack.c.l.b16 %v3012
    %v3192 = vunpack.c.h.b16 %v3012
    %v3193 = vunpack.c.l.b16 %v3013
    %v3194 = vunpack.c.h.b16 %v3013
    %v3195 = vunpack.c.l.b16 %v3014
    %v3196 = vunpack.c.h.b16 %v3014
    %v3197 = vunpack.c.l.b16 %v3015
    %v3198 = vunpack.c.h.b16 %v3015
    %v3199 = vunpack.c.l.b16 %v3016
    %v3200 = vunpack.c.h.b16 %v3016
    %v3201 = vunpack.c.l.b16 %v3017
    %v3202 = vunpack.c.h.b16 %v3017
    %v3203 = vunpack.c.l.b16 %v3018
    %v3204 = vunpack.c.h.b16 %v3018
    %v3205 = vunpack.c.l.b16 %v3019
    %v3206 = vunpack.c.h.b16 %v3019
    %v3207 = vunpack.c.l.b16 %v3020
    %v3208 = vunpack.c.h.b16 %v3020
    %v3209 = vunpack.c.l.b16 %v3021
    %v3210 = vunpack.c.h.b16 %v3021
    %v3211 = vunpack.c.l.b16 %v3022
    %v3212 = vunpack.c.h.b16 %v3022
    %v3213 = vunpack.c.l.b16 %v3023
    %v3214 = vunpack.c.h.b16 %v3023
    %v3215 = vunpack.c.l.b16 %v3024
    %v3216 = vunpack.c.h.b16 %v3024
    %v3217 = vunpack.c.l.b16 %v3025
    %v3218 = vunpack.c.h.b16 %v3025
    %v3219 = vunpack.c.l.b16 %v3026
    %v3220 = vunpack.c.h.b16 %v3026
    %v3221 = vunpack.c.l.b16 %v3027
    %v3222 = vunpack.c.h.b16 %v3027
    %v3223 = vunpack.c.l.b16 %v3028
    %v3224 = vunpack.c.h.b16 %v3028
    %v3225 = vunpack.c.l.b16 %v3029
    %v3226 = vunpack.c.h.b16 %v3029
    %v3227 = vunpack.c.l.b16 %v3030
    %v3228 = vunpack.c.h.b16 %v3030
    %v3229 = vunpack.c.l.b16 %v3031
    %v3230 = vunpack.c.h.b16 %v3031
    %v3231 = vunpack.c.l.b16 %v3032
    %v3232 = vunpack.c.h.b16 %v3032
    %v3233 = vunpack.c.l.b16 %v3033
    %v3234 = vunpack.c.h.b16 %v3033
    %v3235 = vunpack.c.l.b16 %v3034
    %v3236 = vunpack.c.h.b16 %v3034
    %v3237 = vunpack.c.l.b16 %v3035
    %v3238 = vunpack.c.h.b16 %v3035
    %v3239 = vunpack.c.l.b16 %v3036
    %v3240 = vunpack.c.h.b16 %v3036
    %v3241 = vpack.c.b16 %v3115, %v3113
    %v3242 = vpack.c.b16 %v3116, %v3114
    %v3243 = vpack.c.b16 %v3119, %v3117
    %v3244 = vpack.c.b16 %v3120, %v3118
    %v3245 = vpack.c.b16 %v3123, %v3121
    %v3246 = vpack.c.b16 %v3124, %v3122
    %v3247 = vpack.c.b16 %v3127, %v3125
    %v3248 = vpack.c.b16 %v3128, %v3126
    %v3249 = vpack.c.b16 %v3131, %v3129
    %v3250 = vpack.c.b16 %v3132, %v3130
    %v3251 = vpack.c.b16 %v3135, %v3133
    %v3252 = vpack.c.b16 %v3136, %v3134
    %v3253 = vpack.c.b16 %v3139, %v3137
    %v3254 = vpack.c.b16 %v3140, %v3138
    %v3255 = vpack.c.b16 %v3143, %v3141
    %v3256 = vpack.c.b16 %v3144, %v3142
    %v3257 = vpack.c.b16 %v3147, %v3145
    %v3258 = vpack.c.b16 %v3148, %v3146
    %v3259 = vpack.c.b16 %v3151, %v3149
    %v3260 = vpack.c.b16 %v3152, %v3150
    %v3261 = vpack.c.b16 %v3155, %v3153
    %v3262 = vpack.c.b16 %v3156, %v3154
    %v3263 = vpack.c.b16 %v3159, %v3157
    %v3264 = vpack.c.b16 %v3160, %v3158
    %v3265 = vpack.c.b16 %v3163, %v3161
    %v3266 = vpack.c.b16 %v3164, %v3162
    %v3267 = vpack.c.b16 %v3167, %v3165
    %v3268 = vpack.c.b16 %v3168, %v3166
    %v3269 = vpack.c.b16 %v3171, %v3169
    %v3270 = vpack.c.b16 %v3172, %v3170
    %v3271 = vpack.c.b16 %v3175, %v3173
    %v3272 = vpack.c.b16 %v3176, %v3174
    %v3273 = vpack.c.b16 %v3179, %v3177
    %v3274 = vpack.c.b16 %v3180, %v3178
    %v3275 = vpack.c.b16 %v3183, %v3181
    %v3276 = vpack.c.b16 %v3184, %v3182
    %v3277 = vpack.c.b16 %v3187, %v3185
    %v3278 = vpack.c.b16 %v3188, %v3186
    %v3279 = vpack.c.b16 %v3191, %v3189
    %v3280 = vpack.c.b16 %v3192, %v3190
    %v3281 = vpack.c.b16 %v3195, %v3193
    %v3282 = vpack.c.b16 %v3196, %v3194
    %v3283 = vpack.c.b16 %v3199, %v3197
    %v3284 = vpack.c.b16 %v3200, %v3198
    %v3285 = vpack.c.b16 %v3203, %v3201
    %v3286 = vpack.c.b16 %v3204, %v3202
    %v3287 = vpack.c.b16 %v3207, %v3205
    %v3288 = vpack.c.b16 %v3208, %v3206
    %v3289 = vpack.c.b16 %v3211, %v3209
    %v3290 = vpack.c.b16 %v3212, %v3210
    %v3291 = vpack.c.b16 %v3215, %v3213
    %v3292 = vpack.c.b16 %v3216, %v3214
    %v3293 = vpack.c.b16 %v3219, %v3217
    %v3294 = vpack.c.b16 %v3220, %v3218
    %v3295 = vpack.c.b16 %v3223, %v3221
    %v3296 = vpack.c.b16 %v3224, %v3222
    %v3297 = vpack.c.b16 %v3227, %v3225
    %v3298 = vpack.c.b16 %v3228, %v3226
    %v3299 = vpack.c.b16 %v3231, %v3229
    %v3300 = vpack.c.b16 %v3232, %v3230
    %v3301 = vpack.c.b16 %v3235, %v3233
    %v3302 = vpack.c.b16 %v3236, %v3234
    %v3303 = vpack.c.b16 %v3239, %v3237
    %v3304 = vpack.c.b16 %v3240, %v3238
    %3369 = vmatprep.subr.bf16.mxu0 %v3242
    %3370 = vmatpush1.bf16.msra.mxu0 %v3241
    %3371 = vmatprep.subr.bf16.mxu0 %v3244
    %3372 = vmatpush1.bf16.msra.mxu0 %v3243
    %3373 = vmatprep.subr.bf16.mxu0 %v3246
    %3374 = vmatpush1.bf16.msra.mxu0 %v3245
    %3375 = vmatprep.subr.bf16.mxu0 %v3248
    %3376 = vmatpush1.bf16.msra.mxu0 %v3247
    %3377 = vmatprep.subr.bf16.mxu0 %v3250
    %3378 = vmatpush1.bf16.msra.mxu0 %v3249
    %3379 = vmatprep.subr.bf16.mxu0 %v3252
    %3380 = vmatpush1.bf16.msra.mxu0 %v3251
    %3381 = vmatprep.subr.bf16.mxu0 %v3254
    %3382 = vmatpush1.bf16.msra.mxu0 %v3253
    %3383 = vmatprep.subr.bf16.mxu0 %v3256
    %3384 = vmatpush1.bf16.msra.mxu0 %v3255
    %3385 = vmatprep.subr.bf16.mxu0 %v3258
    %3386 = vmatpush1.bf16.msra.mxu0 %v3257
    %3387 = vmatprep.subr.bf16.mxu0 %v3260
    %3388 = vmatpush1.bf16.msra.mxu0 %v3259
    %3389 = vmatprep.subr.bf16.mxu0 %v3262
    %3390 = vmatpush1.bf16.msra.mxu0 %v3261
    %3391 = vmatprep.subr.bf16.mxu0 %v3264
    %3392 = vmatpush1.bf16.msra.mxu0 %v3263
    %3393 = vmatprep.subr.bf16.mxu0 %v3266
    %3394 = vmatpush1.bf16.msra.mxu0 %v3265
    %3395 = vmatprep.subr.bf16.mxu0 %v3268
    %3396 = vmatpush1.bf16.msra.mxu0 %v3267
    %3397 = vmatprep.subr.bf16.mxu0 %v3270
    %3398 = vmatpush1.bf16.msra.mxu0 %v3269
    %3399 = vmatprep.subr.bf16.mxu0 %v3272
    %3400 = vmatpush1.bf16.msra.mxu0 %v3271
    %3401 = vmatprep.mubr.bf16.mxu0 %v2953
    %3402 = vmatmul.mubr.bf16.gmra.mrb[0].mxu0 %v2952
    %v3403 = vpop.f32.mrb[0].mxu0
    %v3404 = vadd.f32 %v3042, %v3403
    %v3405 = vpop.f32.mrb[0].mxu0
    %v3406 = vadd.f32 %v3046, %v3405
    %v3407 = vpop.f32.mrb[0].mxu0
    %v3408 = vpop.f32.mrb[0].mxu0
    %3409 = vdwg.mxu0
    %3410 = vmatprep.subr.bf16.mxu0 %v3274
    %3411 = vmatpush1.bf16.msra.mxu0 %v3273
    %3412 = vmatprep.subr.bf16.mxu0 %v3276
    %3413 = vmatpush1.bf16.msra.mxu0 %v3275
    %3414 = vmatprep.subr.bf16.mxu0 %v3278
    %3415 = vmatpush1.bf16.msra.mxu0 %v3277
    %3416 = vmatprep.subr.bf16.mxu0 %v3280
    %3417 = vmatpush1.bf16.msra.mxu0 %v3279
    %3418 = vmatprep.subr.bf16.mxu0 %v3282
    %3419 = vmatpush1.bf16.msra.mxu0 %v3281
    %3420 = vmatprep.subr.bf16.mxu0 %v3284
    %3421 = vmatpush1.bf16.msra.mxu0 %v3283
    %3422 = vmatprep.subr.bf16.mxu0 %v3286
    %3423 = vmatpush1.bf16.msra.mxu0 %v3285
    %3424 = vmatprep.subr.bf16.mxu0 %v3288
    %3425 = vmatpush1.bf16.msra.mxu0 %v3287
    %3426 = vmatprep.subr.bf16.mxu0 %v3290
    %3427 = vmatpush1.bf16.msra.mxu0 %v3289
    %3428 = vmatprep.subr.bf16.mxu0 %v3292
    %3429 = vmatpush1.bf16.msra.mxu0 %v3291
    %3430 = vmatprep.subr.bf16.mxu0 %v3294
    %3431 = vmatpush1.bf16.msra.mxu0 %v3293
    %3432 = vmatprep.subr.bf16.mxu0 %v3296
    %3433 = vmatpush1.bf16.msra.mxu0 %v3295
    %3434 = vmatprep.subr.bf16.mxu0 %v3298
    %3435 = vmatpush1.bf16.msra.mxu0 %v3297
    %3436 = vmatprep.subr.bf16.mxu0 %v3300
    %3437 = vmatpush1.bf16.msra.mxu0 %v3299
    %3438 = vmatprep.subr.bf16.mxu0 %v3302
    %3439 = vmatpush1.bf16.msra.mxu0 %v3301
    %3440 = vmatprep.subr.bf16.mxu0 %v3304
    %3441 = vmatpush1.bf16.msra.mxu0 %v3303
    %3442 = vmatprep.mubr.bf16.mxu0 %v2955
    %3443 = vmatmul.mubr.bf16.gmra.mrb[0].mxu0 %v2954
    %v3444 = vpop.f32.mrb[0].mxu0
    %v3445 = vadd.f32 %v3404, %v3444
    %v3446 = vpop.f32.mrb[0].mxu0
    %v3447 = vadd.f32 %v3406, %v3446
    %v3448 = vpop.f32.mrb[0].mxu0
    %v3449 = vpop.f32.mrb[0].mxu0
    %3450 = vdwg.mxu0
    %vm3451 = vcmask 818176
    %3452 = vst.msk [vmem:[#allocation11] sm:$0xff] %vm3451, %v3445
    %3455 = vrot.lane.b32.xlu0 %v3445, 28
    %v3456 = vpop.permute.xlu0 %3455
    %3457 = vrot.lane.b32.xlu0 %v3447, 28
    %v3458 = vpop.permute.xlu0 %3457
    %vm3459 = vcmask 228352
    %v3460 = vsel %vm3459, %v3456, %v3458
    %3462 = vst.msk [vmem:[#allocation13] sm:$0xff] %vm3451, %v3460
    // Predicated region
    $region46: #{tpu_custom_call.1} parent=1 // pred_check
      _
    $region47: #{tpu_custom_call.1} parent=1 // pred_check_branch
      %3464 = sbr.rel (0) target = $region49
    $region48: #{tpu_custom_call.1} parent=1 // pred_region
      %s3466 = ssub.s32 256, 256
      %3467 = vsyncadd [#allocation4], %s3466
      %s3469 = sshll.u32 [#allocation10], 4
      %s3470 = int_to_ptr.vmem [resolvable:$true] %s3469
      %3472 = dma.vmem_to_hbm [thread:$0]  %s3470, 256, %s7, [#allocation4]
    $region49: #{tpu_custom_call.1} parent=1 // pred_fallthru
      _
    // Predicated region
    $region50: #{tpu_custom_call.1} parent=1 // pred_check
      _
    $region51: #{tpu_custom_call.1} parent=1 // pred_check_branch
      %3474 = sbr.rel (0) target = $region53
    $region52: #{tpu_custom_call.1} parent=1 // pred_region
      %s3476 = ssub.s32 128, 128
      %3477 = vsyncadd [#allocation12], %s3476
      %s3479 = sshll.u32 [#allocation11], 4
      %s3480 = int_to_ptr.vmem [resolvable:$true] %s3479
      %3482 = dma.vmem_to_hbm [thread:$0]  %s3480, 128, %s8, [#allocation12]
    $region53: #{tpu_custom_call.1} parent=1 // pred_fallthru
      _
    // Predicated region
    $region54: #{tpu_custom_call.1} parent=1 // pred_check
      _
    $region55: #{tpu_custom_call.1} parent=1 // pred_check_branch
      %3484 = sbr.rel (0) target = $region57
    $region56: #{tpu_custom_call.1} parent=1 // pred_region
      %s3486 = ssub.s32 128, 128
      %3487 = vsyncadd [#allocation12], %s3486
      %s3489 = sshll.u32 [#allocation13], 4
      %s3490 = int_to_ptr.vmem [resolvable:$true] %s3489
      %3492 = dma.vmem_to_hbm [thread:$0]  %s3490, 128, %s9, [#allocation12]
    $region57: #{tpu_custom_call.1} parent=1 // pred_fallthru
      _
    // Predicated region
    $region58: #{tpu_custom_call.1} parent=1 // pred_check
      _
    $region59: #{tpu_custom_call.1} parent=1 // pred_check_branch
      %3494 = sbr.rel (0) target = $region61
    $region60: #{tpu_custom_call.1} parent=1 // pred_region
      %3495 = dma.done [#allocation4], 256
    $region61: #{tpu_custom_call.1} parent=1 // pred_fallthru
      _
    // Predicated region
    $region62: #{tpu_custom_call.1} parent=1 // pred_check
      _
    $region63: #{tpu_custom_call.1} parent=1 // pred_check_branch
      %3497 = sbr.rel (0) target = $region65
    $region64: #{tpu_custom_call.1} parent=1 // pred_region
      %3498 = dma.done [#allocation12], 128
    $region65: #{tpu_custom_call.1} parent=1 // pred_fallthru
      _
    // Predicated region
    $region66: #{tpu_custom_call.1} parent=1 // pred_check
      _
    $region67: #{tpu_custom_call.1} parent=1 // pred_check_branch
      %3500 = sbr.rel (0) target = $region69
    $region68: #{tpu_custom_call.1} parent=1 // pred_region
      %3501 = dma.done [#allocation12], 128
    $region69: #{tpu_custom_call.1} parent=1 // pred_fallthru
      _
    %3502 = vsyncpa [#allocation3], 1
    %3503 = vsyncpa [#allocation6], 1
    %3504 = vsyncpa [#allocation9], 1
    %3505 = vsyncpa [#allocation4], 1
    %3506 = vsyncpa [#allocation12], 1

</llo_original>
